<compile_context>
chip_gen: v5e
topology: v5e:2x2
jax: 0.10.0
libtpu: 0.0.40
codegen_flags: <defaults>
</compile_context>

<pallas_src>
import functools

import jax
import jax.numpy as jnp
from jax import lax
from jax.experimental import pallas as pl
from jax.experimental.pallas import tpu as pltpu


_ROW_CHUNK = 512  # rows of the flattened padded conv domain processed per step


def _round_up(x, m):
    return (x + m - 1) // m * m


def _round_down(x, m):
    return x // m * m


def _vmem_limit_bytes():
    """Generation-aware VMEM budget (leave headroom below physical capacity)."""
    try:
        info = pltpu.get_tpu_info()
        cap = int(getattr(info, "vmem_capacity_bytes", 0) or 0)
        if cap > 0:
            return int(min(cap * 3 // 4, 96 * 1024 * 1024))
    except Exception:
        pass
    return 64 * 1024 * 1024


def _chunked_rows(total, chunk, body):
    """Run `body(r0, tr)` over [0, total): full chunks via lax.fori_loop
    (bounded live ranges, no trace-time unrolling) + one static tail."""
    n_full = total // chunk
    rem = total - n_full * chunk
    if n_full > 0:
        def loop_body(step, carry):
            body(step * chunk, chunk)
            return carry
        lax.fori_loop(0, n_full, loop_body, 0, unroll=False)
    if rem > 0:
        body(n_full * chunk, rem)


# ----------------------------- fused kernel ---------------------------------

def _down_block_kernel(x_ref, w1_ref, s1_ref, b1_ref, w2_ref, s2_ref, b2_ref,
                       o_ref, xp1_ref, xp2_ref, *, ho, wo, chunk):
    # x_ref : (1, Ho*Wp, 4*Cin) bf16 -- each 2x2 pooling window packed into the
    #         channel dim, rows already on the flattened padded conv domain
    #         (Wp = Wo + 2; the two pad columns per row hold zeros).
    # w1_ref: (9*Cin,  Cmid) bf16 ; s1/b1: (1, Cmid) f32   (conv bias + BN folded)
    # w2_ref: (9*Cmid, Cout) bf16 ; s2/b2: (1, Cout) f32
    # o_ref : (1, Ho*Wp, Cout) bf16
    # xp1   : (s_rows, Cin)  bf16 VMEM -- zero-haloed pooled activation (flat rows)
    # xp2   : (s_rows, Cmid) bf16 VMEM -- zero-haloed conv1 activation (flat rows)
    wp = wo + 2
    p = ho * wp
    cin = x_ref.shape[-1] // 4
    cmid = xp2_ref.shape[-1]
    s_rows = xp1_ref.shape[0]

    # ---- zero only the halo rows; interior rows are fully overwritten below ----
    top = min(_round_up(wp + 1, 8), s_rows)
    bot = max(min(_round_down((ho + 1) * wp, 8), s_rows), top)
    xp1_ref[pl.ds(0, top), :] = jnp.zeros((top, cin), xp1_ref.dtype)
    xp2_ref[pl.ds(0, top), :] = jnp.zeros((top, cmid), xp2_ref.dtype)
    xp1_ref[pl.ds(bot, s_rows - bot), :] = jnp.zeros((s_rows - bot, cin), xp1_ref.dtype)
    xp2_ref[pl.ds(bot, s_rows - bot), :] = jnp.zeros((s_rows - bot, cmid), xp2_ref.dtype)

    # ---- 2x2 max pool: pure lane-sliced VPU maxes + one store per chunk.
    #      Pad columns of the input are zeros, so pooled pad columns are zero and
    #      the interior pads of xp1 need no extra fill. ----
    def pool_body(r0, tr):
        v = x_ref[0, pl.ds(r0, tr), :]                        # (tr, 4*cin)
        a = jnp.maximum(v[:, :cin], v[:, cin:2 * cin])
        b = jnp.maximum(v[:, 2 * cin:3 * cin], v[:, 3 * cin:])
        xp1_ref[pl.ds(wp + r0, tr), :] = jnp.maximum(a, b)    # data at offset wp

    _chunked_rows(p, chunk, pool_body)

    # ---- 3x3 SAME conv + folded BN + ReLU on the flattened padded domain ----
    def conv_bn_relu(src_ref, w_ref, s_ref, b_ref, store_fn):
        w = w_ref[...]                 # hoisted out of the chunk loop
        s = s_ref[...]
        b = b_ref[...]

        def body(r0, tr):
            taps = jnp.concatenate(
                [src_ref[pl.ds(dy * wp + dx + r0, tr), :]
                 for dy in range(3) for dx in range(3)], axis=-1)   # (tr, 9*C)
            y = jnp.dot(taps, w, preferred_element_type=jnp.float32)
            y = jnp.maximum(y * s + b, 0.0)                          # BN + ReLU
            store_fn(r0, tr, y)

        _chunked_rows(p, chunk, body)

    # conv1: bf16 intermediate stays in VMEM.  The two garbage columns per image
    # row are zeroed in-register (mask from iota) -- they land exactly on xp2's
    # left/right pad slots, so no extra pad fill is needed.
    def store1(r0, tr, y):
        col = (r0 + lax.broadcasted_iota(jnp.int32, (tr, 1), 0)) % wp
        y = jnp.where(col < wo, y, 0.0)
        xp2_ref[pl.ds(wp + 1 + r0, tr), :] = y.astype(xp2_ref.dtype)

    conv_bn_relu(xp1_ref, w1_ref, s1_ref, b1_ref, store1)

    # conv2: bf16 flat output (pad columns are sliced off by the wrapper).
    def store2(r0, tr, y):
        o_ref[0, pl.ds(r0, tr), :] = y.astype(o_ref.dtype)

    conv_bn_relu(xp2_ref, w2_ref, s2_ref, b2_ref, store2)


# ------------------------------ wrappers -------------------------------------

def _fused_down_block(x_flat, w1, s1, b1, w2, s2, b2, *, ho, wo):
    n, p, c4 = x_flat.shape
    cin = c4 // 4
    cmid = w1.shape[1]
    cout = w2.shape[1]
    wp = wo + 2
    s_rows = _round_up((ho + 2) * wp + 2, 8)    # covers the (dy=2,dx=2) tap overrun

    kernel = functools.partial(_down_block_kernel, ho=ho, wo=wo, chunk=_ROW_CHUNK)

    grid_spec = pltpu.PrefetchScalarGridSpec(
        num_scalar_prefetch=0,
        grid=(n,),
        in_specs=[
            pl.BlockSpec((1, p, c4), lambda b: (b, 0, 0)),
            pl.BlockSpec(w1.shape, lambda b: (0, 0)),   # weights/BN resident
            pl.BlockSpec(s1.shape, lambda b: (0, 0)),
            pl.BlockSpec(b1.shape, lambda b: (0, 0)),
            pl.BlockSpec(w2.shape, lambda b: (0, 0)),
            pl.BlockSpec(s2.shape, lambda b: (0, 0)),
            pl.BlockSpec(b2.shape, lambda b: (0, 0)),
        ],
        out_specs=pl.BlockSpec((1, p, cout), lambda b: (b, 0, 0)),
        scratch_shapes=[
            pltpu.VMEM((s_rows, cin), jnp.bfloat16),
            pltpu.VMEM((s_rows, cmid), jnp.bfloat16),
        ],
    )
    return pl.pallas_call(
        kernel,
        out_shape=jax.ShapeDtypeStruct((n, p, cout), jnp.bfloat16),
        grid_spec=grid_spec,
        compiler_params=pltpu.CompilerParams(
            dimension_semantics=("parallel",),      # batch shards across cores
            vmem_limit_bytes=_vmem_limit_bytes(),
        ),
    )(x_flat, w1, s1, b1, w2, s2, b2)


@jax.jit
def down_block_forward(x_nchw, params):
    n, cin, h, w = x_nchw.shape
    assert h % 2 == 0 and w % 2 == 0, "MaxPool2d(2) expects even spatial dims here"
    ho, wo = h // 2, w // 2
    wp = wo + 2
    cout = params["w2"].shape[1]

    # Single fused XLA pre-pass: NCHW f32 -> bf16, pack each 2x2 pooling window
    # into channels, zero-pad Wo by 1 on each side, flatten to the padded conv
    # row domain (Ho*Wp rows).
    # TODO(synk): if the producer already hands NHWC bf16 this pass disappears.
    x = jnp.transpose(x_nchw, (0, 2, 3, 1)).astype(jnp.bfloat16)          # NHWC
    x = x.reshape(n, ho, 2, wo, 2, cin).transpose(0, 1, 3, 2, 4, 5)
    x = x.reshape(n, ho, wo, 4 * cin)
    x = jnp.pad(x, ((0, 0), (0, 0), (1, 1), (0, 0)))                      # (n,ho,wp,4c)
    x = x.reshape(n, ho * wp, 4 * cin)

    out_flat = _fused_down_block(
        x,
        params["w1"], params["scale1"], params["bias1"],
        params["w2"], params["scale2"], params["bias2"],
        ho=ho, wo=wo)

    # Drop the 2 pad columns, back to NCHW f32 (PyTorch interface).
    # TODO(synk): a consumer that accepts NHWC bf16 could read out_flat directly.
    out = out_flat.reshape(n, ho, wp, cout)[:, :, :wo, :]
    return jnp.transpose(out, (0, 3, 1, 2)).astype(jnp.float32)


def init_down_block_params(key, in_channels, out_channels):
    mid_channels = out_channels
    k1, k2 = jax.random.split(key)

    def kaiming(k, ci, co):                 # kaiming_normal_, fan_in = ci*3*3
        fan_in = ci * 9
        return jax.random.normal(k, (3, 3, ci, co), jnp.float32) * jnp.sqrt(2.0 / fan_in)

    w1 = kaiming(k1, in_channels, mid_channels)       # HWIO
    w2 = kaiming(k2, mid_channels, out_channels)
    b1 = jnp.zeros((mid_channels,), jnp.float32)      # constant_(bias, 0)
    b2 = jnp.zeros((out_channels,), jnp.float32)

    def bn_fold(conv_bias, c):
        # BatchNorm2d default init, eval mode: gamma=1, beta=0, mean=0, var=1, eps=1e-5
        gamma = jnp.ones((c,), jnp.float32)
        beta = jnp.zeros((c,), jnp.float32)
        mean = jnp.zeros((c,), jnp.float32)
        var = jnp.ones((c,), jnp.float32)
        eps = 1e-5
        scale = gamma / jnp.sqrt(var + eps)
        bias = beta + scale * (conv_bias - mean)
        return scale.reshape(1, c), bias.reshape(1, c)

    s1, bb1 = bn_fold(b1, mid_channels)
    s2, bb2 = bn_fold(b2, out_channels)
    params = dict(
        # HWIO -> (9*Cin, Cout): K index = (dy*3+dx)*Cin + ci, matches the in-kernel
        # tap-concat order.
        w1=w1.reshape(9 * in_channels, mid_channels).astype(jnp.bfloat16),
        scale1=s1, bias1=bb1,
        w2=w2.reshape(9 * mid_channels, out_channels).astype(jnp.bfloat16),
        scale2=s2, bias2=bb2,
    )
    ref_weights = (w1, b1, w2, b2)
    return params, ref_weights


def _reference(x_nchw, w1, b1, w2, b2):
    # Mirrors the kernel numerics: bf16 activations/weights, f32 accumulation,
    # eval-mode BatchNorm with default stats, ReLU, bf16 intermediate activation.
    x = jnp.transpose(x_nchw, (0, 2, 3, 1)).astype(jnp.bfloat16)
    n, h, w, c = x.shape
    x = x.reshape(n, h // 2, 2, w // 2, 2, c).max(axis=(2, 4))    # MaxPool2d(2)
    eps = 1e-5

    def cbr(inp, wgt, b, out_dtype):
        y = lax.conv_general_dilated(
            inp, wgt.astype(jnp.bfloat16), (1, 1), "SAME",
            dimension_numbers=("NHWC", "HWIO", "NHWC"),
            preferred_element_type=jnp.float32) + b
        y = y * (1.0 / jnp.sqrt(1.0 + eps))
        return jnp.maximum(y, 0.0).astype(out_dtype)

    hmid = cbr(x, w1, b1, jnp.bfloat16)
    y = cbr(hmid, w2, b2, jnp.float32)
    return jnp.transpose(y, (0, 3, 1, 2))


if __name__ == "__main__":
    key = jax.random.PRNGKey(0)
    kx, kp = jax.random.split(key)
    N, Cin, H, W = 2, 4, 16, 16
    Cout = 8
    x = jax.random.normal(kx, (N, Cin, H, W), jnp.float32)

    params, (w1, b1, w2, b2) = init_down_block_params(kp, Cin, Cout)

    out = jax.block_until_ready(down_block_forward(x, params))
    assert out.shape == (N, Cout, H // 2, W // 2), out.shape

    ref = _reference(x, w1, b1, w2, b2)
    if not jnp.allclose(out, ref, atol=3e-2, rtol=3e-2):
        err = jnp.max(jnp.abs(out - ref))
        raise AssertionError(f"Pallas DownBlock does not match reference (max err {err})")

    print("KERNEL_OK")
</pallas_src>

<mosaic_0001>
module attributes {stable_mosaic.version = 11 : i64} {
  func.func @_down_block_kernel(%arg0: i32, %arg1: memref<1x80x16xbf16, #tpu.memory_space<vmem>>, %arg2: memref<36x8xbf16, #tpu.memory_space<vmem>>, %arg3: memref<1x8xf32, #tpu.memory_space<vmem>>, %arg4: memref<1x8xf32, #tpu.memory_space<vmem>>, %arg5: memref<72x8xbf16, #tpu.memory_space<vmem>>, %arg6: memref<1x8xf32, #tpu.memory_space<vmem>>, %arg7: memref<1x8xf32, #tpu.memory_space<vmem>>, %arg8: memref<1x80x8xbf16, #tpu.memory_space<vmem>>, %arg9: memref<104x4xbf16, #tpu.memory_space<vmem>>, %arg10: memref<104x8xbf16, #tpu.memory_space<vmem>>) attributes {dimension_semantics = [#tpu.dimension_semantics<parallel>], iteration_bounds = array<i64: 2>, scalar_prefetch = 0 : i64, scratch_operands = 2 : i64, tpu.core_type = #tpu.core_type<tc>, window_params = [{transform_indices = @transform_0, window_bounds = array<i64: 1, 80, 16>}, {pipeline_mode = #tpu.pipeline_mode<synchronous>, transform_indices = @transform_1, window_bounds = array<i64: 36, 8>}, {pipeline_mode = #tpu.pipeline_mode<synchronous>, transform_indices = @transform_2, window_bounds = array<i64: 1, 8>}, {pipeline_mode = #tpu.pipeline_mode<synchronous>, transform_indices = @transform_3, window_bounds = array<i64: 1, 8>}, {pipeline_mode = #tpu.pipeline_mode<synchronous>, transform_indices = @transform_4, window_bounds = array<i64: 72, 8>}, {pipeline_mode = #tpu.pipeline_mode<synchronous>, transform_indices = @transform_5, window_bounds = array<i64: 1, 8>}, {pipeline_mode = #tpu.pipeline_mode<synchronous>, transform_indices = @transform_6, window_bounds = array<i64: 1, 8>}, {transform_indices = @transform_7, window_bounds = array<i64: 1, 80, 8>}]} {
    %cst = arith.constant 0.000000e+00 : bf16
    %0 = vector.broadcast %cst : bf16 to vector<16x4xbf16>
    %c0 = arith.constant 0 : index
    %c0_0 = arith.constant 0 : index
    %1 = vector.load %arg9[%c0, %c0_0] : memref<104x4xbf16, #tpu.memory_space<vmem>>, vector<16x4xbf16>
    tpu.vector_store %arg9[%c0, %c0_0], %0 {strides = array<i32>} : memref<104x4xbf16, #tpu.memory_space<vmem>>, vector<16x4xbf16>,
    %cst_1 = arith.constant 0.000000e+00 : bf16
    %2 = vector.broadcast %cst_1 : bf16 to vector<16x8xbf16>
    %c0_2 = arith.constant 0 : index
    %c0_3 = arith.constant 0 : index
    %3 = vector.load %arg10[%c0_2, %c0_3] : memref<104x8xbf16, #tpu.memory_space<vmem>>, vector<16x8xbf16>
    tpu.vector_store %arg10[%c0_2, %c0_3], %2 {strides = array<i32>} : memref<104x8xbf16, #tpu.memory_space<vmem>>, vector<16x8xbf16>,
    %cst_4 = arith.constant 0.000000e+00 : bf16
    %4 = vector.broadcast %cst_4 : bf16 to vector<16x4xbf16>
    %c88 = arith.constant 88 : index
    %c0_5 = arith.constant 0 : index
    %5 = vector.load %arg9[%c88, %c0_5] : memref<104x4xbf16, #tpu.memory_space<vmem>>, vector<16x4xbf16>
    tpu.vector_store %arg9[%c88, %c0_5], %4 {strides = array<i32>} : memref<104x4xbf16, #tpu.memory_space<vmem>>, vector<16x4xbf16>,
    %cst_6 = arith.constant 0.000000e+00 : bf16
    %6 = vector.broadcast %cst_6 : bf16 to vector<16x8xbf16>
    %c88_7 = arith.constant 88 : index
    %c0_8 = arith.constant 0 : index
    %7 = vector.load %arg10[%c88_7, %c0_8] : memref<104x8xbf16, #tpu.memory_space<vmem>>, vector<16x8xbf16>
    tpu.vector_store %arg10[%c88_7, %c0_8], %6 {strides = array<i32>} : memref<104x8xbf16, #tpu.memory_space<vmem>>, vector<16x8xbf16>,
    %c0_9 = arith.constant 0 : index
    %c0_10 = arith.constant 0 : index
    %c0_11 = arith.constant 0 : index
    %8 = vector.load %arg1[%c0_9, %c0_10, %c0_11] : memref<1x80x16xbf16, #tpu.memory_space<vmem>>, vector<1x80x16xbf16>
    %9 = vector.shape_cast %8 : vector<1x80x16xbf16> to vector<80x16xbf16>
    %10 = vector.extract_strided_slice %9 {offsets = [0, 0], sizes = [80, 4], strides = [1, 1]} : vector<80x16xbf16> to vector<80x4xbf16>
    %11 = vector.extract_strided_slice %9 {offsets = [0, 4], sizes = [80, 4], strides = [1, 1]} : vector<80x16xbf16> to vector<80x4xbf16>
    %12 = arith.maximumf %10, %11 : vector<80x4xbf16>
    %13 = vector.extract_strided_slice %9 {offsets = [0, 8], sizes = [80, 4], strides = [1, 1]} : vector<80x16xbf16> to vector<80x4xbf16>
    %14 = vector.extract_strided_slice %9 {offsets = [0, 12], sizes = [80, 4], strides = [1, 1]} : vector<80x16xbf16> to vector<80x4xbf16>
    %15 = arith.maximumf %13, %14 : vector<80x4xbf16>
    %16 = arith.maximumf %12, %15 : vector<80x4xbf16>
    %c10 = arith.constant 10 : index
    %c0_12 = arith.constant 0 : index
    %17 = vector.load %arg9[%c10, %c0_12] : memref<104x4xbf16, #tpu.memory_space<vmem>>, vector<80x4xbf16>
    tpu.vector_store %arg9[%c10, %c0_12], %16 {strides = array<i32>} : memref<104x4xbf16, #tpu.memory_space<vmem>>, vector<80x4xbf16>,
    %c0_13 = arith.constant 0 : index
    %c0_14 = arith.constant 0 : index
    %18 = vector.load %arg2[%c0_13, %c0_14] : memref<36x8xbf16, #tpu.memory_space<vmem>>, vector<36x8xbf16>
    %c0_15 = arith.constant 0 : index
    %c0_16 = arith.constant 0 : index
    %19 = vector.load %arg3[%c0_15, %c0_16] : memref<1x8xf32, #tpu.memory_space<vmem>>, vector<1x8xf32>
    %c0_17 = arith.constant 0 : index
    %c0_18 = arith.constant 0 : index
    %20 = vector.load %arg4[%c0_17, %c0_18] : memref<1x8xf32, #tpu.memory_space<vmem>>, vector<1x8xf32>
    %c0_19 = arith.constant 0 : index
    %c0_20 = arith.constant 0 : index
    %21 = vector.load %arg9[%c0_19, %c0_20] : memref<104x4xbf16, #tpu.memory_space<vmem>>, vector<80x4xbf16>
    %c1 = arith.constant 1 : index
    %c0_21 = arith.constant 0 : index
    %22 = vector.load %arg9[%c1, %c0_21] : memref<104x4xbf16, #tpu.memory_space<vmem>>, vector<80x4xbf16>
    %c2 = arith.constant 2 : index
    %c0_22 = arith.constant 0 : index
    %23 = vector.load %arg9[%c2, %c0_22] : memref<104x4xbf16, #tpu.memory_space<vmem>>, vector<80x4xbf16>
    %c10_23 = arith.constant 10 : index
    %c0_24 = arith.constant 0 : index
    %24 = vector.load %arg9[%c10_23, %c0_24] : memref<104x4xbf16, #tpu.memory_space<vmem>>, vector<80x4xbf16>
    %c11 = arith.constant 11 : index
    %c0_25 = arith.constant 0 : index
    %25 = vector.load %arg9[%c11, %c0_25] : memref<104x4xbf16, #tpu.memory_space<vmem>>, vector<80x4xbf16>
    %c12 = arith.constant 12 : index
    %c0_26 = arith.constant 0 : index
    %26 = vector.load %arg9[%c12, %c0_26] : memref<104x4xbf16, #tpu.memory_space<vmem>>, vector<80x4xbf16>
    %c20 = arith.constant 20 : index
    %c0_27 = arith.constant 0 : index
    %27 = vector.load %arg9[%c20, %c0_27] : memref<104x4xbf16, #tpu.memory_space<vmem>>, vector<80x4xbf16>
    %c21 = arith.constant 21 : index
    %c0_28 = arith.constant 0 : index
    %28 = vector.load %arg9[%c21, %c0_28] : memref<104x4xbf16, #tpu.memory_space<vmem>>, vector<80x4xbf16>
    %c22 = arith.constant 22 : index
    %c0_29 = arith.constant 0 : index
    %29 = vector.load %arg9[%c22, %c0_29] : memref<104x4xbf16, #tpu.memory_space<vmem>>, vector<80x4xbf16>
    %30 = tpu.concatenate %21, %22, %23, %24, %25, %26, %27, %28, %29 in 1 : vector<80x4xbf16>, vector<80x4xbf16>, vector<80x4xbf16>, vector<80x4xbf16>, vector<80x4xbf16>, vector<80x4xbf16>, vector<80x4xbf16>, vector<80x4xbf16>, vector<80x4xbf16> -> vector<80x36xbf16>
    %cst_30 = arith.constant dense<0.000000e+00> : vector<80x8xf32>
    %31 = tpu.matmul %30, %18, %cst_30 {dimension_numbers = #tpu.dot_dimension_numbers<[1], [0], [0], [1], [0, 0, 1, 1], [], []>} : vector<80x36xbf16>, vector<36x8xbf16>, vector<80x8xf32> -> vector<80x8xf32>
    %32 = vector.broadcast %19 : vector<1x8xf32> to vector<80x8xf32>
    %33 = arith.mulf %31, %32 : vector<80x8xf32>
    %34 = vector.broadcast %20 : vector<1x8xf32> to vector<80x8xf32>
    %35 = arith.addf %33, %34 : vector<80x8xf32>
    %cst_31 = arith.constant 0.000000e+00 : f32
    %36 = vector.broadcast %cst_31 : f32 to vector<80x8xf32>
    %37 = arith.maximumf %35, %36 : vector<80x8xf32>
    %38 = tpu.iota {dimensions = array<i32: 0>} : vector<80x1xi32>
    %c0_i32 = arith.constant 0 : i32
    %39 = vector.broadcast %c0_i32 : i32 to vector<80x1xi32>
    %40 = arith.addi %39, %38 : vector<80x1xi32>
    %c10_i32 = arith.constant 10 : i32
    %c0_i32_32 = arith.constant 0 : i32
    %41 = arith.cmpi eq, %c10_i32, %c0_i32_32 : i32
    %c1_i32 = arith.constant 1 : i32
    %42 = arith.select %41, %c1_i32, %c10_i32 : i32
    %43 = vector.broadcast %42 : i32 to vector<80x1xi32>
    %44 = arith.remsi %40, %43 : vector<80x1xi32>
    %c0_i32_33 = arith.constant 0 : i32
    %45 = vector.broadcast %c0_i32_33 : i32 to vector<80x1xi32>
    %46 = arith.cmpi ne, %44, %45 : vector<80x1xi32>
    %c0_i32_34 = arith.constant 0 : i32
    %47 = vector.broadcast %c0_i32_34 : i32 to vector<80x1xi32>
    %48 = arith.cmpi slt, %44, %47 : vector<80x1xi32>
    %c0_i32_35 = arith.constant 0 : i32
    %49 = arith.cmpi slt, %42, %c0_i32_35 : i32
    %50 = vector.broadcast %49 : i1 to vector<80x1xi1>
    %51 = vector.broadcast %50 : vector<80x1xi1> to vector<80x1xi1>
    %52 = arith.xori %48, %51 : vector<80x1xi1>
    %53 = arith.andi %52, %46 : vector<80x1xi1>
    %54 = vector.broadcast %42 : i32 to vector<80x1xi32>
    %55 = arith.addi %44, %54 : vector<80x1xi32>
    %56 = arith.select %53, %55, %44 : vector<80x1xi1>, vector<80x1xi32>
    %c8_i32 = arith.constant 8 : i32
    %57 = vector.broadcast %c8_i32 : i32 to vector<80x1xi32>
    %58 = arith.cmpi slt, %56, %57 : vector<80x1xi32>
    %cst_36 = arith.constant 0.000000e+00 : f32
    %59 = vector.shape_cast %58 : vector<80x1xi1> to vector<80x1xi1>
    %60 = vector.broadcast %59 : vector<80x1xi1> to vector<80x8xi1>
    %61 = vector.broadcast %cst_36 : f32 to vector<80x8xf32>
    %62 = arith.select %60, %37, %61 : vector<80x8xi1>, vector<80x8xf32>
    %63 = arith.truncf %62 : vector<80x8xf32> to vector<80x8xbf16>
    %c11_37 = arith.constant 11 : index
    %c0_38 = arith.constant 0 : index
    %64 = vector.load %arg10[%c11_37, %c0_38] : memref<104x8xbf16, #tpu.memory_space<vmem>>, vector<80x8xbf16>
    tpu.vector_store %arg10[%c11_37, %c0_38], %63 {strides = array<i32>} : memref<104x8xbf16, #tpu.memory_space<vmem>>, vector<80x8xbf16>,
    %c0_39 = arith.constant 0 : index
    %c0_40 = arith.constant 0 : index
    %65 = vector.load %arg5[%c0_39, %c0_40] : memref<72x8xbf16, #tpu.memory_space<vmem>>, vector<72x8xbf16>
    %c0_41 = arith.constant 0 : index
    %c0_42 = arith.constant 0 : index
    %66 = vector.load %arg6[%c0_41, %c0_42] : memref<1x8xf32, #tpu.memory_space<vmem>>, vector<1x8xf32>
    %c0_43 = arith.constant 0 : index
    %c0_44 = arith.constant 0 : index
    %67 = vector.load %arg7[%c0_43, %c0_44] : memref<1x8xf32, #tpu.memory_space<vmem>>, vector<1x8xf32>
    %c0_45 = arith.constant 0 : index
    %c0_46 = arith.constant 0 : index
    %68 = vector.load %arg10[%c0_45, %c0_46] : memref<104x8xbf16, #tpu.memory_space<vmem>>, vector<80x8xbf16>
    %c1_47 = arith.constant 1 : index
    %c0_48 = arith.constant 0 : index
    %69 = vector.load %arg10[%c1_47, %c0_48] : memref<104x8xbf16, #tpu.memory_space<vmem>>, vector<80x8xbf16>
    %c2_49 = arith.constant 2 : index
    %c0_50 = arith.constant 0 : index
    %70 = vector.load %arg10[%c2_49, %c0_50] : memref<104x8xbf16, #tpu.memory_space<vmem>>, vector<80x8xbf16>
    %c10_51 = arith.constant 10 : index
    %c0_52 = arith.constant 0 : index
    %71 = vector.load %arg10[%c10_51, %c0_52] : memref<104x8xbf16, #tpu.memory_space<vmem>>, vector<80x8xbf16>
    %c11_53 = arith.constant 11 : index
    %c0_54 = arith.constant 0 : index
    %72 = vector.load %arg10[%c11_53, %c0_54] : memref<104x8xbf16, #tpu.memory_space<vmem>>, vector<80x8xbf16>
    %c12_55 = arith.constant 12 : index
    %c0_56 = arith.constant 0 : index
    %73 = vector.load %arg10[%c12_55, %c0_56] : memref<104x8xbf16, #tpu.memory_space<vmem>>, vector<80x8xbf16>
    %c20_57 = arith.constant 20 : index
    %c0_58 = arith.constant 0 : index
    %74 = vector.load %arg10[%c20_57, %c0_58] : memref<104x8xbf16, #tpu.memory_space<vmem>>, vector<80x8xbf16>
    %c21_59 = arith.constant 21 : index
    %c0_60 = arith.constant 0 : index
    %75 = vector.load %arg10[%c21_59, %c0_60] : memref<104x8xbf16, #tpu.memory_space<vmem>>, vector<80x8xbf16>
    %c22_61 = arith.constant 22 : index
    %c0_62 = arith.constant 0 : index
    %76 = vector.load %arg10[%c22_61, %c0_62] : memref<104x8xbf16, #tpu.memory_space<vmem>>, vector<80x8xbf16>
    %77 = tpu.concatenate %68, %69, %70, %71, %72, %73, %74, %75, %76 in 1 : vector<80x8xbf16>, vector<80x8xbf16>, vector<80x8xbf16>, vector<80x8xbf16>, vector<80x8xbf16>, vector<80x8xbf16>, vector<80x8xbf16>, vector<80x8xbf16>, vector<80x8xbf16> -> vector<80x72xbf16>
    %cst_63 = arith.constant dense<0.000000e+00> : vector<80x8xf32>
    %78 = tpu.matmul %77, %65, %cst_63 {dimension_numbers = #tpu.dot_dimension_numbers<[1], [0], [0], [1], [0, 0, 1, 1], [], []>} : vector<80x72xbf16>, vector<72x8xbf16>, vector<80x8xf32> -> vector<80x8xf32>
    %79 = vector.broadcast %66 : vector<1x8xf32> to vector<80x8xf32>
    %80 = arith.mulf %78, %79 : vector<80x8xf32>
    %81 = vector.broadcast %67 : vector<1x8xf32> to vector<80x8xf32>
    %82 = arith.addf %80, %81 : vector<80x8xf32>
    %cst_64 = arith.constant 0.000000e+00 : f32
    %83 = vector.broadcast %cst_64 : f32 to vector<80x8xf32>
    %84 = arith.maximumf %82, %83 : vector<80x8xf32>
    %85 = arith.truncf %84 : vector<80x8xf32> to vector<80x8xbf16>
    %c0_65 = arith.constant 0 : index
    %c0_66 = arith.constant 0 : index
    %c0_67 = arith.constant 0 : index
    %86 = vector.load %arg8[%c0_65, %c0_66, %c0_67] : memref<1x80x8xbf16, #tpu.memory_space<vmem>>, vector<1x80x8xbf16>
    %87 = vector.shape_cast %86 : vector<1x80x8xbf16> to vector<80x8xbf16>
    %88 = vector.shape_cast %85 : vector<80x8xbf16> to vector<1x80x8xbf16>
    tpu.vector_store %arg8[%c0_65, %c0_66, %c0_67], %88 {strides = array<i32>} : memref<1x80x8xbf16, #tpu.memory_space<vmem>>, vector<1x80x8xbf16>,
    return
  }
  func.func @transform_0(%arg0: i32) -> (i32, i32, i32) {
    %c0_i32 = arith.constant 0 : i32
    %c0_i32_0 = arith.constant 0 : i32
    %c0_i32_1 = arith.constant 0 : i32
    return %arg0, %c0_i32, %c0_i32_0 : i32, i32, i32
  }
  func.func @transform_1(%arg0: i32) -> (i32, i32) {
    %c0_i32 = arith.constant 0 : i32
    %c0_i32_0 = arith.constant 0 : i32
    %c0_i32_1 = arith.constant 0 : i32
    return %c0_i32, %c0_i32_0 : i32, i32
  }
  func.func @transform_2(%arg0: i32) -> (i32, i32) {
    %c0_i32 = arith.constant 0 : i32
    %c0_i32_0 = arith.constant 0 : i32
    %c0_i32_1 = arith.constant 0 : i32
    return %c0_i32, %c0_i32_0 : i32, i32
  }
  func.func @transform_3(%arg0: i32) -> (i32, i32) {
    %c0_i32 = arith.constant 0 : i32
    %c0_i32_0 = arith.constant 0 : i32
    %c0_i32_1 = arith.constant 0 : i32
    return %c0_i32, %c0_i32_0 : i32, i32
  }
  func.func @transform_4(%arg0: i32) -> (i32, i32) {
    %c0_i32 = arith.constant 0 : i32
    %c0_i32_0 = arith.constant 0 : i32
    %c0_i32_1 = arith.constant 0 : i32
    return %c0_i32, %c0_i32_0 : i32, i32
  }
  func.func @transform_5(%arg0: i32) -> (i32, i32) {
    %c0_i32 = arith.constant 0 : i32
    %c0_i32_0 = arith.constant 0 : i32
    %c0_i32_1 = arith.constant 0 : i32
    return %c0_i32, %c0_i32_0 : i32, i32
  }
  func.func @transform_6(%arg0: i32) -> (i32, i32) {
    %c0_i32 = arith.constant 0 : i32
    %c0_i32_0 = arith.constant 0 : i32
    %c0_i32_1 = arith.constant 0 : i32
    return %c0_i32, %c0_i32_0 : i32, i32
  }
  func.func @transform_7(%arg0: i32) -> (i32, i32, i32) {
    %c0_i32 = arith.constant 0 : i32
    %c0_i32_0 = arith.constant 0 : i32
    %c0_i32_1 = arith.constant 0 : i32
    return %arg0, %c0_i32, %c0_i32_0 : i32, i32, i32
  }
}

</mosaic_0001>

<llo_original>
// kernel: down_block_forward.1
$region0: #{down_block_forward.1}
  #allocation0 [shape = 'u32[]', space=smem, size = 0x4, offset = 0x4, fixed_abs, tag = 'smem constant byte address 0x4 - core index']
  #allocation1 [shape = 'u32[72,128]{1,0:T(1,128)}', space=vmem, size = 0x9000, scoped, tag = 'internal scratch']
  #allocation2 [shape = 'bf16[104,4]{1,0:T(8,128)(2,1)}', space=vmem, size = 0x6800, scoped, tag = 'scratch operand']
  #allocation3 [shape = 'bf16[104,8]{1,0:T(8,128)(2,1)}', space=vmem, size = 0x6800, scoped, tag = 'scratch operand']
  %s0 = inlined_call_operand.vmem [shape: bf16[2,80,16], index: 0, kind: input, shape index: {}]
  %s1 = inlined_call_operand.vmem [shape: bf16[36,8], index: 1, kind: input, shape index: {}]
  %s2 = inlined_call_operand.vmem [shape: f32[1,8], index: 2, kind: input, shape index: {}]
  %s3 = inlined_call_operand.vmem [shape: f32[1,8], index: 3, kind: input, shape index: {}]
  %s4 = inlined_call_operand.vmem [shape: bf16[72,8], index: 4, kind: input, shape index: {}]
  %s5 = inlined_call_operand.vmem [shape: f32[1,8], index: 5, kind: input, shape index: {}]
  %s6 = inlined_call_operand.vmem [shape: f32[1,8], index: 6, kind: input, shape index: {}]
  %s7 = inlined_call_operand.vmem [shape: bf16[2,80,8], index: 7, kind: output, shape index: {}]
  %s8 = sld [smem:[#allocation0]]
  $region61: #{down_block_forward.1} parent=0
    _
  %s10 = ssub.s32 1, %s8
  %s11 = scalar_select 0, %s10, %s8
  loop: start=0, step=1, limit=4
  $region2: #{down_block_forward.1} parent=0 // loop_pre_header
    _
  $region3: #{down_block_forward.1} parent=0 // loop_header
    %s13 = sphi 0, %s17
    %p14 = scmp.ge.s32.totalorder %s13, 4
    %s23 = sphi 0, %s25
    %s26 = sphi 0, %s23
    %s27 = sphi 0, %s26
    %s43 = sphi 0, %s27
    %s47 = sphi 0, %s47
    %s49 = sphi 0, %s47
    %s50 = sphi 0, %s49
    %s64 = sphi 0, %s50
    %s68 = sphi 0, %s68
    %s70 = sphi 0, %s68
    %s71 = sphi 0, %s70
    %s85 = sphi 0, %s71
    %s89 = sphi 0, %s89
    %s91 = sphi 0, %s89
    %s92 = sphi 0, %s91
    %s106 = sphi 0, %s92
    %s110 = sphi 0, %s110
    %s112 = sphi 0, %s110
    %s113 = sphi 0, %s112
    %s127 = sphi 0, %s113
    %s131 = sphi 0, %s131
    %s133 = sphi 0, %s131
    %s134 = sphi 0, %s133
    %s148 = sphi 0, %s134
    %s152 = sphi 0, %s152
    %s154 = sphi 0, %s152
    %s155 = sphi 0, %s154
    %s169 = sphi 0, %s155
    %s175 = sphi 0, %s177
    %s178 = sphi 0, %s175
    %s179 = sphi 0, %s178
    %s195 = sphi 0, %s179
  $region4: #{down_block_forward.1} parent=0 // loop_header_branch
    %16 = sbr.rel (%p14) target = $region8
  $region5: #{down_block_forward.1} parent=0 // loop_body
    %s18 = ssub.s32 %s13, 1
    %s19 = ssub.s32 %s13, 2
    %s20 = sadd.s32 %s13, 1
    %s21 = ssub.s32 %s13, %s20
    %p22 = scmp.eq.s32.totalorder %s21, 0
    %s24 = sadd.s32 %s23, 1
    %s25 = scalar_select %p22, %s23, %s24
    %p28 = pneg %p22
    %p29 = scmp.eq.s32.totalorder %s13, 1
    %p30 = por %p28, %p29
    %p31 = scmp.ne.s32.totalorder %s23, %s26
    %p32 = scmp.eq.s32.totalorder %s13, 0
    %p33 = por %p31, %p32
    %p34 = scmp.ne.s32.totalorder %s23, %s26
    %p35 = scmp.eq.s32.totalorder %s18, 1
    %p36 = por %p34, %p35
    %p37 = scmp.ne.s32.totalorder %s26, %s27
    %p38 = scmp.eq.s32.totalorder %s18, 0
    %p39 = por %p37, %p38
    %p40 = scmp.ne.s32.totalorder %s26, %s27
    %p41 = scmp.eq.s32.totalorder %s19, 1
    %p42 = por %p40, %p41
    %p44 = scmp.ne.s32.totalorder %s27, %s43
    %p45 = scmp.eq.s32.totalorder %s19, 0
    %p46 = por %p44, %p45
    %s48 = sadd.s32 %s47, 1
    %p51 = scmp.eq.s32.totalorder %s13, 1
    %p52 = scmp.ne.s32.totalorder %s47, %s49
    %p53 = scmp.eq.s32.totalorder %s13, 0
    %p54 = por %p52, %p53
    %p55 = scmp.ne.s32.totalorder %s47, %s49
    %p56 = scmp.eq.s32.totalorder %s18, 1
    %p57 = por %p55, %p56
    %p58 = scmp.ne.s32.totalorder %s49, %s50
    %p59 = scmp.eq.s32.totalorder %s18, 0
    %p60 = por %p58, %p59
    %p61 = scmp.ne.s32.totalorder %s49, %s50
    %p62 = scmp.eq.s32.totalorder %s19, 1
    %p63 = por %p61, %p62
    %p65 = scmp.ne.s32.totalorder %s50, %s64
    %p66 = scmp.eq.s32.totalorder %s19, 0
    %p67 = por %p65, %p66
    %s69 = sadd.s32 %s68, 1
    %p72 = scmp.eq.s32.totalorder %s13, 1
    %p73 = scmp.ne.s32.totalorder %s68, %s70
    %p74 = scmp.eq.s32.totalorder %s13, 0
    %p75 = por %p73, %p74
    %p76 = scmp.ne.s32.totalorder %s68, %s70
    %p77 = scmp.eq.s32.totalorder %s18, 1
    %p78 = por %p76, %p77
    %p79 = scmp.ne.s32.totalorder %s70, %s71
    %p80 = scmp.eq.s32.totalorder %s18, 0
    %p81 = por %p79, %p80
    %p82 = scmp.ne.s32.totalorder %s70, %s71
    %p83 = scmp.eq.s32.totalorder %s19, 1
    %p84 = por %p82, %p83
    %p86 = scmp.ne.s32.totalorder %s71, %s85
    %p87 = scmp.eq.s32.totalorder %s19, 0
    %p88 = por %p86, %p87
    %s90 = sadd.s32 %s89, 1
    %p93 = scmp.eq.s32.totalorder %s13, 1
    %p94 = scmp.ne.s32.totalorder %s89, %s91
    %p95 = scmp.eq.s32.totalorder %s13, 0
    %p96 = por %p94, %p95
    %p97 = scmp.ne.s32.totalorder %s89, %s91
    %p98 = scmp.eq.s32.totalorder %s18, 1
    %p99 = por %p97, %p98
    %p100 = scmp.ne.s32.totalorder %s91, %s92
    %p101 = scmp.eq.s32.totalorder %s18, 0
    %p102 = por %p100, %p101
    %p103 = scmp.ne.s32.totalorder %s91, %s92
    %p104 = scmp.eq.s32.totalorder %s19, 1
    %p105 = por %p103, %p104
    %p107 = scmp.ne.s32.totalorder %s92, %s106
    %p108 = scmp.eq.s32.totalorder %s19, 0
    %p109 = por %p107, %p108
    %s111 = sadd.s32 %s110, 1
    %p114 = scmp.eq.s32.totalorder %s13, 1
    %p115 = scmp.ne.s32.totalorder %s110, %s112
    %p116 = scmp.eq.s32.totalorder %s13, 0
    %p117 = por %p115, %p116
    %p118 = scmp.ne.s32.totalorder %s110, %s112
    %p119 = scmp.eq.s32.totalorder %s18, 1
    %p120 = por %p118, %p119
    %p121 = scmp.ne.s32.totalorder %s112, %s113
    %p122 = scmp.eq.s32.totalorder %s18, 0
    %p123 = por %p121, %p122
    %p124 = scmp.ne.s32.totalorder %s112, %s113
    %p125 = scmp.eq.s32.totalorder %s19, 1
    %p126 = por %p124, %p125
    %p128 = scmp.ne.s32.totalorder %s113, %s127
    %p129 = scmp.eq.s32.totalorder %s19, 0
    %p130 = por %p128, %p129
    %s132 = sadd.s32 %s131, 1
    %p135 = scmp.eq.s32.totalorder %s13, 1
    %p136 = scmp.ne.s32.totalorder %s131, %s133
    %p137 = scmp.eq.s32.totalorder %s13, 0
    %p138 = por %p136, %p137
    %p139 = scmp.ne.s32.totalorder %s131, %s133
    %p140 = scmp.eq.s32.totalorder %s18, 1
    %p141 = por %p139, %p140
    %p142 = scmp.ne.s32.totalorder %s133, %s134
    %p143 = scmp.eq.s32.totalorder %s18, 0
    %p144 = por %p142, %p143
    %p145 = scmp.ne.s32.totalorder %s133, %s134
    %p146 = scmp.eq.s32.totalorder %s19, 1
    %p147 = por %p145, %p146
    %p149 = scmp.ne.s32.totalorder %s134, %s148
    %p150 = scmp.eq.s32.totalorder %s19, 0
    %p151 = por %p149, %p150
    %s153 = sadd.s32 %s152, 1
    %p156 = scmp.eq.s32.totalorder %s13, 1
    %p157 = scmp.ne.s32.totalorder %s152, %s154
    %p158 = scmp.eq.s32.totalorder %s13, 0
    %p159 = por %p157, %p158
    %p160 = scmp.ne.s32.totalorder %s152, %s154
    %p161 = scmp.eq.s32.totalorder %s18, 1
    %p162 = por %p160, %p161
    %p163 = scmp.ne.s32.totalorder %s154, %s155
    %p164 = scmp.eq.s32.totalorder %s18, 0
    %p165 = por %p163, %p164
    %p166 = scmp.ne.s32.totalorder %s154, %s155
    %p167 = scmp.eq.s32.totalorder %s19, 1
    %p168 = por %p166, %p167
    %p170 = scmp.ne.s32.totalorder %s155, %s169
    %p171 = scmp.eq.s32.totalorder %s19, 0
    %p172 = por %p170, %p171
    %s173 = ssub.s32 %s13, %s20
    %p174 = scmp.eq.s32.totalorder %s173, 0
    %s176 = sadd.s32 %s175, 1
    %s177 = scalar_select %p174, %s175, %s176
    %p180 = pneg %p174
    %p181 = scmp.eq.s32.totalorder %s13, 1
    %p182 = por %p180, %p181
    %p183 = scmp.ne.s32.totalorder %s175, %s178
    %p184 = scmp.eq.s32.totalorder %s13, 0
    %p185 = por %p183, %p184
    %p186 = scmp.ne.s32.totalorder %s175, %s178
    %p187 = scmp.eq.s32.totalorder %s18, 1
    %p188 = por %p186, %p187
    %p189 = scmp.ne.s32.totalorder %s178, %s179
    %p190 = scmp.eq.s32.totalorder %s18, 0
    %p191 = por %p189, %p190
    %p192 = scmp.ne.s32.totalorder %s178, %s179
    %p193 = scmp.eq.s32.totalorder %s19, 1
    %p194 = por %p192, %p193
    %p196 = scmp.ne.s32.totalorder %s179, %s195
    %p197 = scmp.eq.s32.totalorder %s19, 0
    %p198 = por %p196, %p197
    %p199 = scmp.le.s32.totalorder 1, %s13
    %p200 = scmp.lt.s32.totalorder %s13, 3
    %p201 = pnand %p199, %p200
    %p202 = pneg %p201
    // Predicated region
    $region9: #{down_block_forward.1} parent=5 // pred_check
      _
    $region10: #{down_block_forward.1} parent=5 // pred_check_branch
      %204 = sbr.rel (%p201) target = $region12
    $region11: #{down_block_forward.1} parent=5 // pred_region
      %s205 = ssub.s32 %s13, 1
      // Predicated region
      $region13: #{down_block_forward.1} parent=11 // pred_check
        %p206 = pneg %p60
      $region14: #{down_block_forward.1} parent=11 // pred_check_branch
        %208 = sbr.rel (%p206) target = $region16
      $region15: #{down_block_forward.1} parent=11 // pred_region
        _
      $region16: #{down_block_forward.1} parent=11 // pred_fallthru
        _
      // Predicated region
      $region17: #{down_block_forward.1} parent=11 // pred_check
        %p209 = pneg %p81
      $region18: #{down_block_forward.1} parent=11 // pred_check_branch
        %211 = sbr.rel (%p209) target = $region20
      $region19: #{down_block_forward.1} parent=11 // pred_region
        _
      $region20: #{down_block_forward.1} parent=11 // pred_fallthru
        _
      // Predicated region
      $region21: #{down_block_forward.1} parent=11 // pred_check
        %p212 = pneg %p102
      $region22: #{down_block_forward.1} parent=11 // pred_check_branch
        %214 = sbr.rel (%p212) target = $region24
      $region23: #{down_block_forward.1} parent=11 // pred_region
        _
      $region24: #{down_block_forward.1} parent=11 // pred_fallthru
        _
      // Predicated region
      $region25: #{down_block_forward.1} parent=11 // pred_check
        %p215 = pneg %p123
      $region26: #{down_block_forward.1} parent=11 // pred_check_branch
        %217 = sbr.rel (%p215) target = $region28
      $region27: #{down_block_forward.1} parent=11 // pred_region
        _
      $region28: #{down_block_forward.1} parent=11 // pred_fallthru
        _
      // Predicated region
      $region29: #{down_block_forward.1} parent=11 // pred_check
        %p218 = pneg %p144
      $region30: #{down_block_forward.1} parent=11 // pred_check_branch
        %220 = sbr.rel (%p218) target = $region32
      $region31: #{down_block_forward.1} parent=11 // pred_region
        _
      $region32: #{down_block_forward.1} parent=11 // pred_fallthru
        _
      // Predicated region
      $region33: #{down_block_forward.1} parent=11 // pred_check
        %p221 = pneg %p165
      $region34: #{down_block_forward.1} parent=11 // pred_check_branch
        %223 = sbr.rel (%p221) target = $region36
      $region35: #{down_block_forward.1} parent=11 // pred_region
        _
      $region36: #{down_block_forward.1} parent=11 // pred_fallthru
        _
    $region12: #{down_block_forward.1} parent=5 // pred_fallthru
      _
    %p224 = scmp.lt.s32.totalorder %s13, 2
    // Predicated region
    $region37: #{down_block_forward.1} parent=5 // pred_check
      %p225 = pneg %p224
    $region38: #{down_block_forward.1} parent=5 // pred_check_branch
      %227 = sbr.rel (%p225) target = $region40
    $region39: #{down_block_forward.1} parent=5 // pred_region
      // Predicated region
      $region41: #{down_block_forward.1} parent=39 // pred_check
        %p228 = pneg %p33
      $region42: #{down_block_forward.1} parent=39 // pred_check_branch
        %230 = sbr.rel (%p228) target = $region44
      $region43: #{down_block_forward.1} parent=39 // pred_region
        %p231 = scmp.lt.s32.totalorder %s13, 1
        %s232 = scalar_select %p231, %s13, 1
        %s233 = smul.addr %s232, 10
        %s234 = smul.addr %s233, 4
        %s235 = scalar_lea.vmem %s0, %s234
      $region44: #{down_block_forward.1} parent=39 // pred_fallthru
        _
    $region40: #{down_block_forward.1} parent=5 // pred_fallthru
      _
    %p236 = scmp.le.s32.totalorder 1, %s13
    %p237 = scmp.lt.s32.totalorder %s13, 3
    %p238 = pnand %p236, %p237
    %p239 = pneg %p238
    // Predicated region
    $region45: #{down_block_forward.1} parent=5 // pred_check
      _
    $region46: #{down_block_forward.1} parent=5 // pred_check_branch
      %241 = sbr.rel (%p238) target = $region48
    $region47: #{down_block_forward.1} parent=5 // pred_region
      %s242 = ssub.s32 %s13, 1
      %p243 = scmp.lt.s32.totalorder %s18, 1
      %s244 = scalar_select %p243, %s18, 1
      %s245 = smul.addr %s244, 10
      %s246 = smul.addr %s245, 4
      %s247 = scalar_lea.vmem %s0, %s246
      %p248 = pneg %p39
      %p249 = pneg %p36
      %p250 = pneg %p60
      %p251 = pneg %p57
      %p252 = pneg %p81
      %p253 = pneg %p78
      %p254 = pneg %p102
      %p255 = pneg %p99
      %p256 = pneg %p123
      %p257 = pneg %p120
      %p258 = pneg %p144
      %p259 = pneg %p141
      %p260 = pneg %p165
      %p261 = pneg %p162
      %p262 = pneg %p191
      %p263 = pneg %p188
      %p264 = scmp.lt.s32.totalorder %s18, 1
      %s265 = scalar_select %p264, %s18, 1
      %s266 = smul.addr %s265, 10
      %s267 = smul.addr %s266, 4
      %s268 = scalar_lea.vmem %s7, %s267
      %p269 = scmp.lt.s32.totalorder %s18, 1
      %s270 = scalar_select %p269, %s18, 1
      %s271 = smul.addr %s270, 10
      %s272 = smul.addr %s271, 4
      %s273 = scalar_lea.vmem %s0, %s272
      %p274 = scmp.lt.s32.totalorder %s18, 1
      %s275 = scalar_select %p274, %s18, 1
      %s276 = smul.addr %s275, 10
      %s277 = smul.addr %s276, 4
      %s278 = scalar_lea.vmem %s7, %s277
      %vm280 = vcmask 27648
      %281 = vst.msk [vmem:[#allocation2] sm:$0xf] %vm280, 0
      %282 = vst.msk [vmem:[#allocation2 + $0x4] sm:$0xf] %vm280, 0
      %vm283 = vcmask 60416
      %284 = vst.msk [vmem:[#allocation3] sm:$0xf] %vm283, 0
      %285 = vst.msk [vmem:[#allocation3 + $0x4] sm:$0xf] %vm283, 0
      %286 = vst.msk [vmem:[#allocation2 + $0x2c] sm:$0xf] %vm280, 0
      %287 = vst.msk [vmem:[#allocation2 + $0x30] sm:$0xf] %vm280, 0
      %288 = vst.msk [vmem:[#allocation3 + $0x2c] sm:$0xf] %vm283, 0
      %289 = vst.msk [vmem:[#allocation3 + $0x30] sm:$0xf] %vm283, 0
      %v290 = vld [vmem:[%s273] sm:$0xf]
      %v291 = vld [vmem:[%s273 + $0x4] sm:$0xf]
      %v292 = vld [vmem:[%s273 + $0x8] sm:$0xf]
      %v293 = vld [vmem:[%s273 + $0xc] sm:$0xf]
      %v294 = vld [vmem:[%s273 + $0x10] sm:$0xf]
      %v295 = vld [vmem:[%s273 + $0x14] sm:$0xf]
      %v296 = vld [vmem:[%s273 + $0x18] sm:$0xf]
      %v297 = vld [vmem:[%s273 + $0x1c] sm:$0xf]
      %v298 = vld [vmem:[%s273 + $0x20] sm:$0xf]
      %v299 = vld [vmem:[%s273 + $0x24] sm:$0xf]
      %v300 = vunpack.c.l.bf16 %v290
      %v301 = vunpack.c.l.bf16 %v291
      %v302 = vunpack.c.l.bf16 %v292
      %v303 = vunpack.c.l.bf16 %v293
      %v304 = vunpack.c.l.bf16 %v294
      %v305 = vunpack.c.l.bf16 %v295
      %v306 = vunpack.c.l.bf16 %v296
      %v307 = vunpack.c.l.bf16 %v297
      %v308 = vunpack.c.l.bf16 %v298
      %v309 = vunpack.c.l.bf16 %v299
      %320 = vrot.lane.b32.xlu0 %v300, 124
      %v321 = vpop.permute.xlu0 %320
      %322 = vrot.lane.b32.xlu0 %v301, 124
      %v323 = vpop.permute.xlu0 %322
      %324 = vrot.lane.b32.xlu0 %v302, 124
      %v325 = vpop.permute.xlu0 %324
      %326 = vrot.lane.b32.xlu0 %v303, 124
      %v327 = vpop.permute.xlu0 %326
      %328 = vrot.lane.b32.xlu0 %v304, 124
      %v329 = vpop.permute.xlu0 %328
      %330 = vrot.lane.b32.xlu0 %v305, 124
      %v331 = vpop.permute.xlu0 %330
      %332 = vrot.lane.b32.xlu0 %v306, 124
      %v333 = vpop.permute.xlu0 %332
      %334 = vrot.lane.b32.xlu0 %v307, 124
      %v335 = vpop.permute.xlu0 %334
      %336 = vrot.lane.b32.xlu0 %v308, 124
      %v337 = vpop.permute.xlu0 %336
      %338 = vrot.lane.b32.xlu0 %v309, 124
      %v339 = vpop.permute.xlu0 %338
      %v350 = vmax.f32 %v300, %v321
      %v351 = vmax.f32 %v301, %v323
      %v352 = vmax.f32 %v302, %v325
      %v353 = vmax.f32 %v303, %v327
      %v354 = vmax.f32 %v304, %v329
      %v355 = vmax.f32 %v305, %v331
      %v356 = vmax.f32 %v306, %v333
      %v357 = vmax.f32 %v307, %v335
      %v358 = vmax.f32 %v308, %v337
      %v359 = vmax.f32 %v309, %v339
      %v360 = vpack.c.bf16 %v350, %v350
      %v361 = vpack.c.bf16 %v351, %v351
      %v362 = vpack.c.bf16 %v352, %v352
      %v363 = vpack.c.bf16 %v353, %v353
      %v364 = vpack.c.bf16 %v354, %v354
      %v365 = vpack.c.bf16 %v355, %v355
      %v366 = vpack.c.bf16 %v356, %v356
      %v367 = vpack.c.bf16 %v357, %v357
      %v368 = vpack.c.bf16 %v358, %v358
      %v369 = vpack.c.bf16 %v359, %v359
      %v370 = vunpack.c.l.bf16 %v360
      %v371 = vunpack.c.l.bf16 %v361
      %v372 = vunpack.c.l.bf16 %v362
      %v373 = vunpack.c.l.bf16 %v363
      %v374 = vunpack.c.l.bf16 %v364
      %v375 = vunpack.c.l.bf16 %v365
      %v376 = vunpack.c.l.bf16 %v366
      %v377 = vunpack.c.l.bf16 %v367
      %v378 = vunpack.c.l.bf16 %v368
      %v379 = vunpack.c.l.bf16 %v369
      %390 = vrot.lane.b32.xlu0 %v370, 120
      %v391 = vpop.permute.xlu0 %390
      %392 = vrot.lane.b32.xlu0 %v371, 120
      %v393 = vpop.permute.xlu0 %392
      %394 = vrot.lane.b32.xlu0 %v372, 120
      %v395 = vpop.permute.xlu0 %394
      %396 = vrot.lane.b32.xlu0 %v373, 120
      %v397 = vpop.permute.xlu0 %396
      %398 = vrot.lane.b32.xlu0 %v374, 120
      %v399 = vpop.permute.xlu0 %398
      %400 = vrot.lane.b32.xlu0 %v375, 120
      %v401 = vpop.permute.xlu0 %400
      %402 = vrot.lane.b32.xlu0 %v376, 120
      %v403 = vpop.permute.xlu0 %402
      %404 = vrot.lane.b32.xlu0 %v377, 120
      %v405 = vpop.permute.xlu0 %404
      %406 = vrot.lane.b32.xlu0 %v378, 120
      %v407 = vpop.permute.xlu0 %406
      %408 = vrot.lane.b32.xlu0 %v379, 120
      %v409 = vpop.permute.xlu0 %408
      %v420 = vmax.f32 %v370, %v391
      %v421 = vmax.f32 %v371, %v393
      %v422 = vmax.f32 %v372, %v395
      %v423 = vmax.f32 %v373, %v397
      %v424 = vmax.f32 %v374, %v399
      %v425 = vmax.f32 %v375, %v401
      %v426 = vmax.f32 %v376, %v403
      %v427 = vmax.f32 %v377, %v405
      %v428 = vmax.f32 %v378, %v407
      %v429 = vmax.f32 %v379, %v409
      %v430 = vpack.c.bf16 %v420, %v420
      %v431 = vpack.c.bf16 %v421, %v421
      %v432 = vpack.c.bf16 %v422, %v422
      %v433 = vpack.c.bf16 %v423, %v423
      %v434 = vpack.c.bf16 %v424, %v424
      %v435 = vpack.c.bf16 %v425, %v425
      %v436 = vpack.c.bf16 %v426, %v426
      %v437 = vpack.c.bf16 %v427, %v427
      %v438 = vpack.c.bf16 %v428, %v428
      %v439 = vpack.c.bf16 %v429, %v429
      %vm450 = vcmask 1040384
      %vm451 = vcmask 1044484
      %vm452 = vmor %vm450, %vm451
      %v453 = vrot.slane %v430, 7
      %v454 = vrot.slane %v453, 4
      %v455 = vrot.slane %v431, 7
      %v456 = vsel %vm452, %v454, %v455
      %v457 = vrot.slane %v455, 4
      %v458 = vrot.slane %v432, 7
      %v459 = vsel %vm452, %v457, %v458
      %v460 = vrot.slane %v458, 4
      %v461 = vrot.slane %v433, 7
      %v462 = vsel %vm452, %v460, %v461
      %v463 = vrot.slane %v461, 4
      %v464 = vrot.slane %v434, 7
      %v465 = vsel %vm452, %v463, %v464
      %v466 = vrot.slane %v464, 4
      %v467 = vrot.slane %v435, 7
      %v468 = vsel %vm452, %v466, %v467
      %v469 = vrot.slane %v467, 4
      %v470 = vrot.slane %v436, 7
      %v471 = vsel %vm452, %v469, %v470
      %v472 = vrot.slane %v470, 4
      %v473 = vrot.slane %v437, 7
      %v474 = vsel %vm452, %v472, %v473
      %v475 = vrot.slane %v473, 4
      %v476 = vrot.slane %v438, 7
      %v477 = vsel %vm452, %v475, %v476
      %v478 = vrot.slane %v476, 4
      %v479 = vrot.slane %v439, 7
      %v480 = vsel %vm452, %v478, %v479
      %v481 = vrot.slane %v479, 4
      %vm493 = vcmask 27649
      %494 = vst.msk [vmem:[#allocation2 + $0x4] sm:$0xe] %vm493, %v453
      %495 = vst.msk [vmem:[#allocation2 + $0x8] sm:$0xf] %vm280, %v456
      %496 = vst.msk [vmem:[#allocation2 + $0xc] sm:$0xf] %vm280, %v459
      %497 = vst.msk [vmem:[#allocation2 + $0x10] sm:$0xf] %vm280, %v462
      %498 = vst.msk [vmem:[#allocation2 + $0x14] sm:$0xf] %vm280, %v465
      %499 = vst.msk [vmem:[#allocation2 + $0x18] sm:$0xf] %vm280, %v468
      %500 = vst.msk [vmem:[#allocation2 + $0x1c] sm:$0xf] %vm280, %v471
      %501 = vst.msk [vmem:[#allocation2 + $0x20] sm:$0xf] %vm280, %v474
      %502 = vst.msk [vmem:[#allocation2 + $0x24] sm:$0xf] %vm280, %v477
      %503 = vst.msk [vmem:[#allocation2 + $0x28] sm:$0xf] %vm280, %v480
      %vm504 = vcmask 24576
      %505 = vst.msk [vmem:[#allocation2 + $0x2c] sm:$0x1] %vm504, %v481
      %v506 = vld [vmem:[%s1] sm:$0xf]
      %v507 = vld [vmem:[%s1 + $0x4] sm:$0xf]
      %v508 = vld [vmem:[%s1 + $0x8] sm:$0xf]
      %v509 = vld [vmem:[%s1 + $0xc] sm:$0xf]
      %v510 = vld [vmem:[%s1 + $0x10] sm:$0x3]
      %v511 = vld [vmem:[%s2] sm:$0x1]
      %v512 = vld [vmem:[%s3] sm:$0x1]
      %v513 = vld [vmem:[#allocation2] sm:$0xf]
      %v514 = vld [vmem:[#allocation2 + $0x4] sm:$0xf]
      %v515 = vld [vmem:[#allocation2 + $0x8] sm:$0xf]
      %v516 = vld [vmem:[#allocation2 + $0xc] sm:$0xf]
      %v517 = vld [vmem:[#allocation2 + $0x10] sm:$0xf]
      %v518 = vld [vmem:[#allocation2 + $0x14] sm:$0xf]
      %v519 = vld [vmem:[#allocation2 + $0x18] sm:$0xf]
      %v520 = vld [vmem:[#allocation2 + $0x1c] sm:$0xf]
      %v521 = vld [vmem:[#allocation2 + $0x20] sm:$0xf]
      %v522 = vld [vmem:[#allocation2 + $0x24] sm:$0xf]
      %v523 = vld [vmem:[#allocation2 + $0x28] sm:$0x1]
      %v524 = vld [vmem:[#allocation2] sm:$0xe]
      %v525 = vld [vmem:[#allocation2 + $0x4] sm:$0xe]
      %v526 = vld [vmem:[#allocation2 + $0x28] sm:$0xf]
      %v527 = vld [vmem:[#allocation2 + $0x2c] sm:$0x1]
      %v528 = vld [vmem:[#allocation2 + $0x2c] sm:$0x3]
      %v529 = vld [vmem:[#allocation2 + $0x4] sm:$0xc]
      %v530 = vld [vmem:[#allocation2 + $0x8] sm:$0xc]
      %v531 = vld [vmem:[#allocation2 + $0x2c] sm:$0xf]
      %v532 = vld [vmem:[#allocation2 + $0x30] sm:$0x3]
      %v533 = vld [vmem:[#allocation2 + $0x30] sm:$0x7]
      %v534 = vld [vmem:[#allocation2 + $0x8] sm:$0x8]
      %v545 = vunpack.c.l.b16 %v513
      %v546 = vunpack.c.l.b16 %v514
      %v547 = vunpack.c.l.b16 %v515
      %v548 = vunpack.c.l.b16 %v516
      %v549 = vunpack.c.l.b16 %v517
      %v550 = vunpack.c.l.b16 %v518
      %v551 = vunpack.c.l.b16 %v519
      %v552 = vunpack.c.l.b16 %v520
      %v553 = vunpack.c.l.b16 %v521
      %v554 = vunpack.c.l.b16 %v522
      %v555 = vpack.c.b16 %v546, %v545
      %v556 = vpack.c.b16 %v548, %v547
      %v557 = vpack.c.b16 %v550, %v549
      %v558 = vpack.c.b16 %v552, %v551
      %v559 = vpack.c.b16 %v554, %v553
      %v561 = vunpack.c.l.b16 %v523
      %v562 = vpack.c.b16 %v561, %v561
      %vm563 = vsmask.f32 7424
      %v565 = vshrl.u32 %v555, 16
      %v567 = vshll.u32 %v555, 16
      %v569 = vrot.slane %v567, 1
      %v570 = vor.u32 %v565, %v569
      %v572 = vshll.u32 %v556, 16
      %v574 = vrot.slane %v572, 1
      %v575 = vsel %vm563, %v570, %v574
      %v576 = vshrl.u32 %v556, 16
      %v578 = vor.u32 %v576, %v574
      %v580 = vshll.u32 %v557, 16
      %v582 = vrot.slane %v580, 1
      %v583 = vsel %vm563, %v578, %v582
      %v584 = vshrl.u32 %v557, 16
      %v586 = vor.u32 %v584, %v582
      %v588 = vshll.u32 %v558, 16
      %v590 = vrot.slane %v588, 1
      %v591 = vsel %vm563, %v586, %v590
      %v592 = vshrl.u32 %v558, 16
      %v594 = vor.u32 %v592, %v590
      %v596 = vshll.u32 %v559, 16
      %v598 = vrot.slane %v596, 1
      %v599 = vsel %vm563, %v594, %v598
      %v600 = vshrl.u32 %v559, 16
      %v602 = vor.u32 %v600, %v598
      %v604 = vshll.u32 %v562, 16
      %v606 = vrot.slane %v604, 1
      %v607 = vsel %vm563, %v602, %v606
      %608 = vrot.lane.b32.xlu0 %v575, 4
      %v609 = vpop.permute.xlu0 %608
      %610 = vrot.lane.b32.xlu0 %v583, 4
      %v611 = vpop.permute.xlu0 %610
      %612 = vrot.lane.b32.xlu0 %v591, 4
      %v613 = vpop.permute.xlu0 %612
      %614 = vrot.lane.b32.xlu0 %v599, 4
      %v615 = vpop.permute.xlu0 %614
      %616 = vrot.lane.b32.xlu0 %v607, 4
      %v617 = vpop.permute.xlu0 %616
      %v619 = vunpack.c.l.b16 %v524
      %v620 = vpack.c.b16 %v546, %v619
      %vm621 = vcmask 1046528
      %v622 = vrot.slane %v620, 1
      %v623 = vrot.slane %v556, 1
      %v624 = vsel %vm621, %v622, %v623
      %v625 = vrot.slane %v557, 1
      %v626 = vsel %vm621, %v623, %v625
      %v627 = vrot.slane %v558, 1
      %v628 = vsel %vm621, %v625, %v627
      %v629 = vrot.slane %v559, 1
      %v630 = vsel %vm621, %v627, %v629
      %v631 = vrot.slane %v562, 1
      %v632 = vsel %vm621, %v629, %v631
      %633 = vrot.lane.b32.xlu0 %v624, 8
      %v634 = vpop.permute.xlu0 %633
      %635 = vrot.lane.b32.xlu0 %v626, 8
      %v636 = vpop.permute.xlu0 %635
      %637 = vrot.lane.b32.xlu0 %v628, 8
      %v638 = vpop.permute.xlu0 %637
      %639 = vrot.lane.b32.xlu0 %v630, 8
      %v640 = vpop.permute.xlu0 %639
      %641 = vrot.lane.b32.xlu0 %v632, 8
      %v642 = vpop.permute.xlu0 %641
      %v646 = vunpack.c.l.b16 %v525
      %v647 = vunpack.c.l.b16 %v526
      %v648 = vunpack.c.l.b16 %v527
      %v649 = vpack.c.b16 %v547, %v646
      %v650 = vpack.c.b16 %v549, %v548
      %v651 = vpack.c.b16 %v551, %v550
      %v652 = vpack.c.b16 %v553, %v552
      %v653 = vpack.c.b16 %v647, %v554
      %v654 = vpack.c.b16 %v648, %v648
      %v655 = vrot.slane %v649, 1
      %v656 = vrot.slane %v650, 1
      %v657 = vsel %vm621, %v655, %v656
      %v658 = vrot.slane %v651, 1
      %v659 = vsel %vm621, %v656, %v658
      %v660 = vrot.slane %v652, 1
      %v661 = vsel %vm621, %v658, %v660
      %v662 = vrot.slane %v653, 1
      %v663 = vsel %vm621, %v660, %v662
      %v664 = vrot.slane %v654, 1
      %v665 = vsel %vm621, %v662, %v664
      %666 = vrot.lane.b32.xlu0 %v657, 12
      %v667 = vpop.permute.xlu0 %666
      %668 = vrot.lane.b32.xlu0 %v659, 12
      %v669 = vpop.permute.xlu0 %668
      %670 = vrot.lane.b32.xlu0 %v661, 12
      %v671 = vpop.permute.xlu0 %670
      %672 = vrot.lane.b32.xlu0 %v663, 12
      %v673 = vpop.permute.xlu0 %672
      %674 = vrot.lane.b32.xlu0 %v665, 12
      %v675 = vpop.permute.xlu0 %674
      %v677 = vunpack.c.l.b16 %v528
      %v678 = vpack.c.b16 %v677, %v677
      %vm679 = vsmask.f32 6400
      %v681 = vshrl.u32 %v649, 16
      %v683 = vrot.slane %v681, 1
      %v684 = vshll.u32 %v649, 16
      %v686 = vrot.slane %v684, 2
      %v687 = vor.u32 %v683, %v686
      %v689 = vshrl.u32 %v650, 16
      %v691 = vrot.slane %v689, 1
      %v692 = vshll.u32 %v650, 16
      %v694 = vrot.slane %v692, 2
      %v695 = vor.u32 %v691, %v694
      %v696 = vsel %vm679, %v687, %v695
      %v698 = vshrl.u32 %v651, 16
      %v700 = vrot.slane %v698, 1
      %v701 = vshll.u32 %v651, 16
      %v703 = vrot.slane %v701, 2
      %v704 = vor.u32 %v700, %v703
      %v705 = vsel %vm679, %v695, %v704
      %v707 = vshrl.u32 %v652, 16
      %v709 = vrot.slane %v707, 1
      %v710 = vshll.u32 %v652, 16
      %v712 = vrot.slane %v710, 2
      %v713 = vor.u32 %v709, %v712
      %v714 = vsel %vm679, %v704, %v713
      %v716 = vshrl.u32 %v653, 16
      %v718 = vrot.slane %v716, 1
      %v719 = vshll.u32 %v653, 16
      %v721 = vrot.slane %v719, 2
      %v722 = vor.u32 %v718, %v721
      %v723 = vsel %vm679, %v713, %v722
      %v725 = vshrl.u32 %v678, 16
      %v727 = vrot.slane %v725, 1
      %v728 = vshll.u32 %v678, 16
      %v730 = vrot.slane %v728, 2
      %v731 = vor.u32 %v727, %v730
      %v732 = vsel %vm679, %v722, %v731
      %733 = vrot.lane.b32.xlu0 %v696, 16
      %v734 = vpop.permute.xlu0 %733
      %735 = vrot.lane.b32.xlu0 %v705, 16
      %v736 = vpop.permute.xlu0 %735
      %737 = vrot.lane.b32.xlu0 %v714, 16
      %v738 = vpop.permute.xlu0 %737
      %739 = vrot.lane.b32.xlu0 %v723, 16
      %v740 = vpop.permute.xlu0 %739
      %741 = vrot.lane.b32.xlu0 %v732, 16
      %v742 = vpop.permute.xlu0 %741
      %v744 = vunpack.c.l.b16 %v529
      %v745 = vpack.c.b16 %v547, %v744
      %vm746 = vcmask 1045504
      %v747 = vrot.slane %v745, 2
      %v748 = vrot.slane %v650, 2
      %v749 = vsel %vm746, %v747, %v748
      %v750 = vrot.slane %v651, 2
      %v751 = vsel %vm746, %v748, %v750
      %v752 = vrot.slane %v652, 2
      %v753 = vsel %vm746, %v750, %v752
      %v754 = vrot.slane %v653, 2
      %v755 = vsel %vm746, %v752, %v754
      %v756 = vrot.slane %v678, 2
      %v757 = vsel %vm746, %v754, %v756
      %758 = vrot.lane.b32.xlu0 %v749, 20
      %v759 = vpop.permute.xlu0 %758
      %760 = vrot.lane.b32.xlu0 %v751, 20
      %v761 = vpop.permute.xlu0 %760
      %762 = vrot.lane.b32.xlu0 %v753, 20
      %v763 = vpop.permute.xlu0 %762
      %764 = vrot.lane.b32.xlu0 %v755, 20
      %v765 = vpop.permute.xlu0 %764
      %766 = vrot.lane.b32.xlu0 %v757, 20
      %v767 = vpop.permute.xlu0 %766
      %v771 = vunpack.c.l.b16 %v530
      %v772 = vunpack.c.l.b16 %v531
      %v773 = vunpack.c.l.b16 %v532
      %v774 = vpack.c.b16 %v548, %v771
      %v775 = vpack.c.b16 %v772, %v647
      %v776 = vpack.c.b16 %v773, %v773
      %v777 = vrot.slane %v774, 2
      %v778 = vrot.slane %v557, 2
      %v779 = vsel %vm746, %v777, %v778
      %v780 = vrot.slane %v558, 2
      %v781 = vsel %vm746, %v778, %v780
      %v782 = vrot.slane %v559, 2
      %v783 = vsel %vm746, %v780, %v782
      %v784 = vrot.slane %v775, 2
      %v785 = vsel %vm746, %v782, %v784
      %v786 = vrot.slane %v776, 2
      %v787 = vsel %vm746, %v784, %v786
      %788 = vrot.lane.b32.xlu0 %v779, 24
      %v789 = vpop.permute.xlu0 %788
      %790 = vrot.lane.b32.xlu0 %v781, 24
      %v791 = vpop.permute.xlu0 %790
      %792 = vrot.lane.b32.xlu0 %v783, 24
      %v793 = vpop.permute.xlu0 %792
      %794 = vrot.lane.b32.xlu0 %v785, 24
      %v795 = vpop.permute.xlu0 %794
      %796 = vrot.lane.b32.xlu0 %v787, 24
      %v797 = vpop.permute.xlu0 %796
      %v799 = vunpack.c.l.b16 %v533
      %v800 = vpack.c.b16 %v799, %v799
      %vm801 = vsmask.f32 5376
      %v803 = vshrl.u32 %v774, 16
      %v805 = vrot.slane %v803, 2
      %v806 = vshll.u32 %v774, 16
      %v808 = vrot.slane %v806, 3
      %v809 = vor.u32 %v805, %v808
      %v810 = vrot.slane %v584, 2
      %v811 = vrot.slane %v580, 3
      %v812 = vor.u32 %v810, %v811
      %v813 = vsel %vm801, %v809, %v812
      %v814 = vrot.slane %v592, 2
      %v815 = vrot.slane %v588, 3
      %v816 = vor.u32 %v814, %v815
      %v817 = vsel %vm801, %v812, %v816
      %v818 = vrot.slane %v600, 2
      %v819 = vrot.slane %v596, 3
      %v820 = vor.u32 %v818, %v819
      %v821 = vsel %vm801, %v816, %v820
      %v823 = vshrl.u32 %v775, 16
      %v825 = vrot.slane %v823, 2
      %v826 = vshll.u32 %v775, 16
      %v828 = vrot.slane %v826, 3
      %v829 = vor.u32 %v825, %v828
      %v830 = vsel %vm801, %v820, %v829
      %v832 = vshrl.u32 %v800, 16
      %v834 = vrot.slane %v832, 2
      %v835 = vshll.u32 %v800, 16
      %v837 = vrot.slane %v835, 3
      %v838 = vor.u32 %v834, %v837
      %v839 = vsel %vm801, %v829, %v838
      %840 = vrot.lane.b32.xlu0 %v813, 28
      %v841 = vpop.permute.xlu0 %840
      %842 = vrot.lane.b32.xlu0 %v817, 28
      %v843 = vpop.permute.xlu0 %842
      %844 = vrot.lane.b32.xlu0 %v821, 28
      %v845 = vpop.permute.xlu0 %844
      %846 = vrot.lane.b32.xlu0 %v830, 28
      %v847 = vpop.permute.xlu0 %846
      %848 = vrot.lane.b32.xlu0 %v839, 28
      %v849 = vpop.permute.xlu0 %848
      %v851 = vunpack.c.l.b16 %v534
      %v852 = vpack.c.b16 %v548, %v851
      %vm853 = vcmask 1044480
      %v854 = vrot.slane %v852, 3
      %v855 = vrot.slane %v557, 3
      %v856 = vsel %vm853, %v854, %v855
      %v857 = vrot.slane %v558, 3
      %v858 = vsel %vm853, %v855, %v857
      %v859 = vrot.slane %v559, 3
      %v860 = vsel %vm853, %v857, %v859
      %v861 = vrot.slane %v775, 3
      %v862 = vsel %vm853, %v859, %v861
      %v863 = vrot.slane %v800, 3
      %v864 = vsel %vm853, %v861, %v863
      %865 = vrot.lane.b32.xlu0 %v856, 32
      %v866 = vpop.permute.xlu0 %865
      %867 = vrot.lane.b32.xlu0 %v858, 32
      %v868 = vpop.permute.xlu0 %867
      %869 = vrot.lane.b32.xlu0 %v860, 32
      %v870 = vpop.permute.xlu0 %869
      %871 = vrot.lane.b32.xlu0 %v862, 32
      %v872 = vpop.permute.xlu0 %871
      %873 = vrot.lane.b32.xlu0 %v864, 32
      %v874 = vpop.permute.xlu0 %873
      %vm875 = vcmask 31744
      %v877 = vsel %vm875, %v555, %v609
      %v879 = vsel %vm875, %v556, %v611
      %v881 = vsel %vm875, %v557, %v613
      %v883 = vsel %vm875, %v558, %v615
      %v885 = vsel %vm875, %v559, %v617
      %vm886 = vcmask 64512
      %v888 = vsel %vm886, %v877, %v634
      %v890 = vsel %vm886, %v879, %v636
      %v892 = vsel %vm886, %v881, %v638
      %v894 = vsel %vm886, %v883, %v640
      %v896 = vsel %vm886, %v885, %v642
      %vm897 = vcmask 97280
      %v899 = vsel %vm897, %v888, %v667
      %v901 = vsel %vm897, %v890, %v669
      %v903 = vsel %vm897, %v892, %v671
      %v905 = vsel %vm897, %v894, %v673
      %v907 = vsel %vm897, %v896, %v675
      %vm908 = vcmask 130048
      %v910 = vsel %vm908, %v899, %v734
      %v912 = vsel %vm908, %v901, %v736
      %v914 = vsel %vm908, %v903, %v738
      %v916 = vsel %vm908, %v905, %v740
      %v918 = vsel %vm908, %v907, %v742
      %vm919 = vcmask 162816
      %v921 = vsel %vm919, %v910, %v759
      %v923 = vsel %vm919, %v912, %v761
      %v925 = vsel %vm919, %v914, %v763
      %v927 = vsel %vm919, %v916, %v765
      %v929 = vsel %vm919, %v918, %v767
      %vm930 = vcmask 195584
      %v932 = vsel %vm930, %v921, %v789
      %v934 = vsel %vm930, %v923, %v791
      %v936 = vsel %vm930, %v925, %v793
      %v938 = vsel %vm930, %v927, %v795
      %v940 = vsel %vm930, %v929, %v797
      %vm941 = vcmask 228352
      %v943 = vsel %vm941, %v932, %v841
      %v945 = vsel %vm941, %v934, %v843
      %v947 = vsel %vm941, %v936, %v845
      %v949 = vsel %vm941, %v938, %v847
      %v951 = vsel %vm941, %v940, %v849
      %vm952 = vcmask 261120
      %v954 = vsel %vm952, %v943, %v866
      %v956 = vsel %vm952, %v945, %v868
      %v958 = vsel %vm952, %v947, %v870
      %v960 = vsel %vm952, %v949, %v872
      %v962 = vsel %vm952, %v951, %v874
      %v968 = vunpack.c.l.b16 %v506
      %v969 = vunpack.c.l.b16 %v507
      %v970 = vunpack.c.l.b16 %v508
      %v971 = vunpack.c.l.b16 %v509
      %v972 = vunpack.c.l.b16 %v510
      %v973 = vpack.c.b16 %v969, %v968
      %v974 = vpack.c.b16 %v971, %v970
      %v975 = vpack.c.b16 %v972, %v972
      %vm978 = vcmask 293888
      %v979 = vsel %vm978, %v954, 0
      %v981 = vsel %vm978, %v956, 0
      %v983 = vsel %vm978, %v958, 0
      %v985 = vsel %vm978, %v960, 0
      %v987 = vsel %vm978, %v962, 0
      %vm989 = vcmask 1041408
      %v991 = vsel %vm989, %v975, 0
      %993 = vmatpush.bf16.msra.mxu0 0
      %994 = vmatpush.bf16.msra.mxu0 0
      %995 = vmatpush.bf16.msra.mxu0 0
      %996 = vmatpush.bf16.msra.mxu0 0
      %997 = vmatpush.bf16.msra.mxu0 0
      %998 = vmatpush.bf16.msra.mxu0 %v991
      %999 = vmatpush.bf16.msra.mxu0 %v974
      %1000 = vmatpush.bf16.msra.mxu0 %v973
      %1001 = vmatmul.bf16.gmra.mxu0 %v979
      %v1002 = vpop.f32.mrf.mxu0
      %v1003 = vadd.f32 0.0, %v1002
      %v1004 = vpop.f32.mrf.mxu0
      %v1005 = vadd.f32 0.0, %v1004
      %1006 = vmatmul.bf16.gmra.mxu0 %v981
      %v1007 = vpop.f32.mrf.mxu0
      %v1008 = vadd.f32 0.0, %v1007
      %v1009 = vpop.f32.mrf.mxu0
      %v1010 = vadd.f32 0.0, %v1009
      %1011 = vmatmul.bf16.gmra.mxu0 %v983
      %v1012 = vpop.f32.mrf.mxu0
      %v1013 = vadd.f32 0.0, %v1012
      %v1014 = vpop.f32.mrf.mxu0
      %v1015 = vadd.f32 0.0, %v1014
      %1016 = vmatmul.bf16.gmra.mxu0 %v985
      %v1017 = vpop.f32.mrf.mxu0
      %v1018 = vadd.f32 0.0, %v1017
      %v1019 = vpop.f32.mrf.mxu0
      %v1020 = vadd.f32 0.0, %v1019
      %1021 = vmatmul.bf16.gmra.mxu0 %v987
      %v1022 = vpop.f32.mrf.mxu0
      %v1023 = vadd.f32 0.0, %v1022
      %v1024 = vpop.f32.mrf.mxu0
      %v1025 = vadd.f32 0.0, %v1024
      %1026 = vdwg.mxu0
      %v1028 = vperm.slane %v511, 0
      %v1030 = vmul.f32 %v1003, %v1028
      %v1031 = vmul.f32 %v1005, %v1028
      %v1032 = vmul.f32 %v1008, %v1028
      %v1033 = vmul.f32 %v1010, %v1028
      %v1034 = vmul.f32 %v1013, %v1028
      %v1035 = vmul.f32 %v1015, %v1028
      %v1036 = vmul.f32 %v1018, %v1028
      %v1037 = vmul.f32 %v1020, %v1028
      %v1038 = vmul.f32 %v1023, %v1028
      %v1039 = vmul.f32 %v1025, %v1028
      %v1041 = vperm.slane %v512, 0
      %v1043 = vadd.f32 %v1030, %v1041
      %v1044 = vadd.f32 %v1031, %v1041
      %v1045 = vadd.f32 %v1032, %v1041
      %v1046 = vadd.f32 %v1033, %v1041
      %v1047 = vadd.f32 %v1034, %v1041
      %v1048 = vadd.f32 %v1035, %v1041
      %v1049 = vadd.f32 %v1036, %v1041
      %v1050 = vadd.f32 %v1037, %v1041
      %v1051 = vadd.f32 %v1038, %v1041
      %v1052 = vadd.f32 %v1039, %v1041
      %v1053 = vmax.f32 %v1043, 0.0
      %v1054 = vmax.f32 %v1044, 0.0
      %v1055 = vmax.f32 %v1045, 0.0
      %v1056 = vmax.f32 %v1046, 0.0
      %v1057 = vmax.f32 %v1047, 0.0
      %v1058 = vmax.f32 %v1048, 0.0
      %v1059 = vmax.f32 %v1049, 0.0
      %v1060 = vmax.f32 %v1050, 0.0
      %v1061 = vmax.f32 %v1051, 0.0
      %v1062 = vmax.f32 %v1052, 0.0
      %v1063 = vlaneseq
      %v1064 = vshrl.u32 %v1063, 7
      %v1065 = vadd.s32 %v1064, 8
      %v1066 = vadd.s32 %v1064, 16
      %v1067 = vadd.s32 %v1064, 24
      %v1068 = vadd.s32 %v1064, 32
      %v1069 = vadd.s32 %v1064, 40
      %v1070 = vadd.s32 %v1064, 48
      %v1071 = vadd.s32 %v1064, 56
      %v1072 = vadd.s32 %v1064, 64
      %v1073 = vadd.s32 %v1064, 72
      %vm1074 = vcmp.lt.s32.totalorder %v1064, 0
      %v1075 = vsub.s32 0, %v1064
      %v1076 = vsel %vm1074, %v1075, %v1064
      %v1077 = vand.u32 %v1076, 65535
      %v1078 = vshrl.u32 %v1076, 16
      %v1080 = vmul.u32 %v1077, 52429
      %v1081 = vmul.u32 %v1077, 52428
      %v1082 = vmul.u32 %v1078, 52429
      %v1083 = vmul.u32 %v1078, 52428
      %v1084 = vshll.u32 %v1081, 16
      %v1085 = vshrl.u32 %v1081, 16
      %v1086 = vshll.u32 %v1082, 16
      %v1087 = vshrl.u32 %v1082, 16
      %vm1088 = vc.u32 %v1080, %v1084
      %v1089 = vsel %vm1088, 1, 0
      %v1090 = vadd.s32 %v1080, %v1084
      %v1091 = vadd.s32 %v1083, %v1089
      %vm1092 = vc.u32 %v1090, %v1086
      %v1093 = vsel %vm1092, 1, 0
      %v1094 = vadd.s32 %v1090, %v1086
      %v1095 = vadd.s32 %v1091, %v1093
      %v1096 = vadd.s32 %v1095, %v1085
      %v1097 = vadd.s32 %v1096, %v1087
      %v1098 = vshrl.u32 %v1097, 3
      %v1099 = vmul.u32 %v1098, 10
      %v1100 = vsub.s32 %v1076, %v1099
      %v1101 = vsub.s32 0, %v1100
      %v1102 = vsel %vm1074, %v1101, %v1100
      %vm1103 = vcmp.lt.s32.totalorder %v1065, 0
      %v1104 = vsub.s32 0, %v1065
      %v1105 = vsel %vm1103, %v1104, %v1065
      %v1106 = vand.u32 %v1105, 65535
      %v1107 = vshrl.u32 %v1105, 16
      %v1109 = vmul.u32 %v1106, 52429
      %v1110 = vmul.u32 %v1106, 52428
      %v1111 = vmul.u32 %v1107, 52429
      %v1112 = vmul.u32 %v1107, 52428
      %v1113 = vshll.u32 %v1110, 16
      %v1114 = vshrl.u32 %v1110, 16
      %v1115 = vshll.u32 %v1111, 16
      %v1116 = vshrl.u32 %v1111, 16
      %vm1117 = vc.u32 %v1109, %v1113
      %v1118 = vsel %vm1117, 1, 0
      %v1119 = vadd.s32 %v1109, %v1113
      %v1120 = vadd.s32 %v1112, %v1118
      %vm1121 = vc.u32 %v1119, %v1115
      %v1122 = vsel %vm1121, 1, 0
      %v1123 = vadd.s32 %v1119, %v1115
      %v1124 = vadd.s32 %v1120, %v1122
      %v1125 = vadd.s32 %v1124, %v1114
      %v1126 = vadd.s32 %v1125, %v1116
      %v1127 = vshrl.u32 %v1126, 3
      %v1128 = vmul.u32 %v1127, 10
      %v1129 = vsub.s32 %v1105, %v1128
      %v1130 = vsub.s32 0, %v1129
      %v1131 = vsel %vm1103, %v1130, %v1129
      %vm1132 = vcmp.lt.s32.totalorder %v1066, 0
      %v1133 = vsub.s32 0, %v1066
      %v1134 = vsel %vm1132, %v1133, %v1066
      %v1135 = vand.u32 %v1134, 65535
      %v1136 = vshrl.u32 %v1134, 16
      %v1138 = vmul.u32 %v1135, 52429
      %v1139 = vmul.u32 %v1135, 52428
      %v1140 = vmul.u32 %v1136, 52429
      %v1141 = vmul.u32 %v1136, 52428
      %v1142 = vshll.u32 %v1139, 16
      %v1143 = vshrl.u32 %v1139, 16
      %v1144 = vshll.u32 %v1140, 16
      %v1145 = vshrl.u32 %v1140, 16
      %vm1146 = vc.u32 %v1138, %v1142
      %v1147 = vsel %vm1146, 1, 0
      %v1148 = vadd.s32 %v1138, %v1142
      %v1149 = vadd.s32 %v1141, %v1147
      %vm1150 = vc.u32 %v1148, %v1144
      %v1151 = vsel %vm1150, 1, 0
      %v1152 = vadd.s32 %v1148, %v1144
      %v1153 = vadd.s32 %v1149, %v1151
      %v1154 = vadd.s32 %v1153, %v1143
      %v1155 = vadd.s32 %v1154, %v1145
      %v1156 = vshrl.u32 %v1155, 3
      %v1157 = vmul.u32 %v1156, 10
      %v1158 = vsub.s32 %v1134, %v1157
      %v1159 = vsub.s32 0, %v1158
      %v1160 = vsel %vm1132, %v1159, %v1158
      %vm1161 = vcmp.lt.s32.totalorder %v1067, 0
      %v1162 = vsub.s32 0, %v1067
      %v1163 = vsel %vm1161, %v1162, %v1067
      %v1164 = vand.u32 %v1163, 65535
      %v1165 = vshrl.u32 %v1163, 16
      %v1167 = vmul.u32 %v1164, 52429
      %v1168 = vmul.u32 %v1164, 52428
      %v1169 = vmul.u32 %v1165, 52429
      %v1170 = vmul.u32 %v1165, 52428
      %v1171 = vshll.u32 %v1168, 16
      %v1172 = vshrl.u32 %v1168, 16
      %v1173 = vshll.u32 %v1169, 16
      %v1174 = vshrl.u32 %v1169, 16
      %vm1175 = vc.u32 %v1167, %v1171
      %v1176 = vsel %vm1175, 1, 0
      %v1177 = vadd.s32 %v1167, %v1171
      %v1178 = vadd.s32 %v1170, %v1176
      %vm1179 = vc.u32 %v1177, %v1173
      %v1180 = vsel %vm1179, 1, 0
      %v1181 = vadd.s32 %v1177, %v1173
      %v1182 = vadd.s32 %v1178, %v1180
      %v1183 = vadd.s32 %v1182, %v1172
      %v1184 = vadd.s32 %v1183, %v1174
      %v1185 = vshrl.u32 %v1184, 3
      %v1186 = vmul.u32 %v1185, 10
      %v1187 = vsub.s32 %v1163, %v1186
      %v1188 = vsub.s32 0, %v1187
      %v1189 = vsel %vm1161, %v1188, %v1187
      %vm1190 = vcmp.lt.s32.totalorder %v1068, 0
      %v1191 = vsub.s32 0, %v1068
      %v1192 = vsel %vm1190, %v1191, %v1068
      %v1193 = vand.u32 %v1192, 65535
      %v1194 = vshrl.u32 %v1192, 16
      %v1196 = vmul.u32 %v1193, 52429
      %v1197 = vmul.u32 %v1193, 52428
      %v1198 = vmul.u32 %v1194, 52429
      %v1199 = vmul.u32 %v1194, 52428
      %v1200 = vshll.u32 %v1197, 16
      %v1201 = vshrl.u32 %v1197, 16
      %v1202 = vshll.u32 %v1198, 16
      %v1203 = vshrl.u32 %v1198, 16
      %vm1204 = vc.u32 %v1196, %v1200
      %v1205 = vsel %vm1204, 1, 0
      %v1206 = vadd.s32 %v1196, %v1200
      %v1207 = vadd.s32 %v1199, %v1205
      %vm1208 = vc.u32 %v1206, %v1202
      %v1209 = vsel %vm1208, 1, 0
      %v1210 = vadd.s32 %v1206, %v1202
      %v1211 = vadd.s32 %v1207, %v1209
      %v1212 = vadd.s32 %v1211, %v1201
      %v1213 = vadd.s32 %v1212, %v1203
      %v1214 = vshrl.u32 %v1213, 3
      %v1215 = vmul.u32 %v1214, 10
      %v1216 = vsub.s32 %v1192, %v1215
      %v1217 = vsub.s32 0, %v1216
      %v1218 = vsel %vm1190, %v1217, %v1216
      %vm1219 = vcmp.lt.s32.totalorder %v1069, 0
      %v1220 = vsub.s32 0, %v1069
      %v1221 = vsel %vm1219, %v1220, %v1069
      %v1222 = vand.u32 %v1221, 65535
      %v1223 = vshrl.u32 %v1221, 16
      %v1225 = vmul.u32 %v1222, 52429
      %v1226 = vmul.u32 %v1222, 52428
      %v1227 = vmul.u32 %v1223, 52429
      %v1228 = vmul.u32 %v1223, 52428
      %v1229 = vshll.u32 %v1226, 16
      %v1230 = vshrl.u32 %v1226, 16
      %v1231 = vshll.u32 %v1227, 16
      %v1232 = vshrl.u32 %v1227, 16
      %vm1233 = vc.u32 %v1225, %v1229
      %v1234 = vsel %vm1233, 1, 0
      %v1235 = vadd.s32 %v1225, %v1229
      %v1236 = vadd.s32 %v1228, %v1234
      %vm1237 = vc.u32 %v1235, %v1231
      %v1238 = vsel %vm1237, 1, 0
      %v1239 = vadd.s32 %v1235, %v1231
      %v1240 = vadd.s32 %v1236, %v1238
      %v1241 = vadd.s32 %v1240, %v1230
      %v1242 = vadd.s32 %v1241, %v1232
      %v1243 = vshrl.u32 %v1242, 3
      %v1244 = vmul.u32 %v1243, 10
      %v1245 = vsub.s32 %v1221, %v1244
      %v1246 = vsub.s32 0, %v1245
      %v1247 = vsel %vm1219, %v1246, %v1245
      %vm1248 = vcmp.lt.s32.totalorder %v1070, 0
      %v1249 = vsub.s32 0, %v1070
      %v1250 = vsel %vm1248, %v1249, %v1070
      %v1251 = vand.u32 %v1250, 65535
      %v1252 = vshrl.u32 %v1250, 16
      %v1254 = vmul.u32 %v1251, 52429
      %v1255 = vmul.u32 %v1251, 52428
      %v1256 = vmul.u32 %v1252, 52429
      %v1257 = vmul.u32 %v1252, 52428
      %v1258 = vshll.u32 %v1255, 16
      %v1259 = vshrl.u32 %v1255, 16
      %v1260 = vshll.u32 %v1256, 16
      %v1261 = vshrl.u32 %v1256, 16
      %vm1262 = vc.u32 %v1254, %v1258
      %v1263 = vsel %vm1262, 1, 0
      %v1264 = vadd.s32 %v1254, %v1258
      %v1265 = vadd.s32 %v1257, %v1263
      %vm1266 = vc.u32 %v1264, %v1260
      %v1267 = vsel %vm1266, 1, 0
      %v1268 = vadd.s32 %v1264, %v1260
      %v1269 = vadd.s32 %v1265, %v1267
      %v1270 = vadd.s32 %v1269, %v1259
      %v1271 = vadd.s32 %v1270, %v1261
      %v1272 = vshrl.u32 %v1271, 3
      %v1273 = vmul.u32 %v1272, 10
      %v1274 = vsub.s32 %v1250, %v1273
      %v1275 = vsub.s32 0, %v1274
      %v1276 = vsel %vm1248, %v1275, %v1274
      %vm1277 = vcmp.lt.s32.totalorder %v1071, 0
      %v1278 = vsub.s32 0, %v1071
      %v1279 = vsel %vm1277, %v1278, %v1071
      %v1280 = vand.u32 %v1279, 65535
      %v1281 = vshrl.u32 %v1279, 16
      %v1283 = vmul.u32 %v1280, 52429
      %v1284 = vmul.u32 %v1280, 52428
      %v1285 = vmul.u32 %v1281, 52429
      %v1286 = vmul.u32 %v1281, 52428
      %v1287 = vshll.u32 %v1284, 16
      %v1288 = vshrl.u32 %v1284, 16
      %v1289 = vshll.u32 %v1285, 16
      %v1290 = vshrl.u32 %v1285, 16
      %vm1291 = vc.u32 %v1283, %v1287
      %v1292 = vsel %vm1291, 1, 0
      %v1293 = vadd.s32 %v1283, %v1287
      %v1294 = vadd.s32 %v1286, %v1292
      %vm1295 = vc.u32 %v1293, %v1289
      %v1296 = vsel %vm1295, 1, 0
      %v1297 = vadd.s32 %v1293, %v1289
      %v1298 = vadd.s32 %v1294, %v1296
      %v1299 = vadd.s32 %v1298, %v1288
      %v1300 = vadd.s32 %v1299, %v1290
      %v1301 = vshrl.u32 %v1300, 3
      %v1302 = vmul.u32 %v1301, 10
      %v1303 = vsub.s32 %v1279, %v1302
      %v1304 = vsub.s32 0, %v1303
      %v1305 = vsel %vm1277, %v1304, %v1303
      %vm1306 = vcmp.lt.s32.totalorder %v1072, 0
      %v1307 = vsub.s32 0, %v1072
      %v1308 = vsel %vm1306, %v1307, %v1072
      %v1309 = vand.u32 %v1308, 65535
      %v1310 = vshrl.u32 %v1308, 16
      %v1312 = vmul.u32 %v1309, 52429
      %v1313 = vmul.u32 %v1309, 52428
      %v1314 = vmul.u32 %v1310, 52429
      %v1315 = vmul.u32 %v1310, 52428
      %v1316 = vshll.u32 %v1313, 16
      %v1317 = vshrl.u32 %v1313, 16
      %v1318 = vshll.u32 %v1314, 16
      %v1319 = vshrl.u32 %v1314, 16
      %vm1320 = vc.u32 %v1312, %v1316
      %v1321 = vsel %vm1320, 1, 0
      %v1322 = vadd.s32 %v1312, %v1316
      %v1323 = vadd.s32 %v1315, %v1321
      %vm1324 = vc.u32 %v1322, %v1318
      %v1325 = vsel %vm1324, 1, 0
      %v1326 = vadd.s32 %v1322, %v1318
      %v1327 = vadd.s32 %v1323, %v1325
      %v1328 = vadd.s32 %v1327, %v1317
      %v1329 = vadd.s32 %v1328, %v1319
      %v1330 = vshrl.u32 %v1329, 3
      %v1331 = vmul.u32 %v1330, 10
      %v1332 = vsub.s32 %v1308, %v1331
      %v1333 = vsub.s32 0, %v1332
      %v1334 = vsel %vm1306, %v1333, %v1332
      %vm1335 = vcmp.lt.s32.totalorder %v1073, 0
      %v1336 = vsub.s32 0, %v1073
      %v1337 = vsel %vm1335, %v1336, %v1073
      %v1338 = vand.u32 %v1337, 65535
      %v1339 = vshrl.u32 %v1337, 16
      %v1341 = vmul.u32 %v1338, 52429
      %v1342 = vmul.u32 %v1338, 52428
      %v1343 = vmul.u32 %v1339, 52429
      %v1344 = vmul.u32 %v1339, 52428
      %v1345 = vshll.u32 %v1342, 16
      %v1346 = vshrl.u32 %v1342, 16
      %v1347 = vshll.u32 %v1343, 16
      %v1348 = vshrl.u32 %v1343, 16
      %vm1349 = vc.u32 %v1341, %v1345
      %v1350 = vsel %vm1349, 1, 0
      %v1351 = vadd.s32 %v1341, %v1345
      %v1352 = vadd.s32 %v1344, %v1350
      %vm1353 = vc.u32 %v1351, %v1347
      %v1354 = vsel %vm1353, 1, 0
      %v1355 = vadd.s32 %v1351, %v1347
      %v1356 = vadd.s32 %v1352, %v1354
      %v1357 = vadd.s32 %v1356, %v1346
      %v1358 = vadd.s32 %v1357, %v1348
      %v1359 = vshrl.u32 %v1358, 3
      %v1360 = vmul.u32 %v1359, 10
      %v1361 = vsub.s32 %v1337, %v1360
      %v1362 = vsub.s32 0, %v1361
      %v1363 = vsel %vm1335, %v1362, %v1361
      %vm1364 = vcmp.ne.s32.totalorder %v1102, 0
      %vm1365 = vcmp.ne.s32.totalorder %v1131, 0
      %vm1366 = vcmp.ne.s32.totalorder %v1160, 0
      %vm1367 = vcmp.ne.s32.totalorder %v1189, 0
      %vm1368 = vcmp.ne.s32.totalorder %v1218, 0
      %vm1369 = vcmp.ne.s32.totalorder %v1247, 0
      %vm1370 = vcmp.ne.s32.totalorder %v1276, 0
      %vm1371 = vcmp.ne.s32.totalorder %v1305, 0
      %vm1372 = vcmp.ne.s32.totalorder %v1334, 0
      %vm1373 = vcmp.ne.s32.totalorder %v1363, 0
      %vm1374 = vcmp.lt.s32.totalorder %v1102, 0
      %vm1375 = vcmp.lt.s32.totalorder %v1131, 0
      %vm1376 = vcmp.lt.s32.totalorder %v1160, 0
      %vm1377 = vcmp.lt.s32.totalorder %v1189, 0
      %vm1378 = vcmp.lt.s32.totalorder %v1218, 0
      %vm1379 = vcmp.lt.s32.totalorder %v1247, 0
      %vm1380 = vcmp.lt.s32.totalorder %v1276, 0
      %vm1381 = vcmp.lt.s32.totalorder %v1305, 0
      %vm1382 = vcmp.lt.s32.totalorder %v1334, 0
      %vm1383 = vcmp.lt.s32.totalorder %v1363, 0
      %vm1384 = vmand %vm1374, %vm1364
      %vm1385 = vmand %vm1375, %vm1365
      %vm1386 = vmand %vm1376, %vm1366
      %vm1387 = vmand %vm1377, %vm1367
      %vm1388 = vmand %vm1378, %vm1368
      %vm1389 = vmand %vm1379, %vm1369
      %vm1390 = vmand %vm1380, %vm1370
      %vm1391 = vmand %vm1381, %vm1371
      %vm1392 = vmand %vm1382, %vm1372
      %vm1393 = vmand %vm1383, %vm1373
      %v1394 = vadd.s32 %v1102, 10
      %v1395 = vadd.s32 %v1131, 10
      %v1396 = vadd.s32 %v1160, 10
      %v1397 = vadd.s32 %v1189, 10
      %v1398 = vadd.s32 %v1218, 10
      %v1399 = vadd.s32 %v1247, 10
      %v1400 = vadd.s32 %v1276, 10
      %v1401 = vadd.s32 %v1305, 10
      %v1402 = vadd.s32 %v1334, 10
      %v1403 = vadd.s32 %v1363, 10
      %v1404 = vsel %vm1384, %v1394, %v1102
      %v1405 = vsel %vm1385, %v1395, %v1131
      %v1406 = vsel %vm1386, %v1396, %v1160
      %v1407 = vsel %vm1387, %v1397, %v1189
      %v1408 = vsel %vm1388, %v1398, %v1218
      %v1409 = vsel %vm1389, %v1399, %v1247
      %v1410 = vsel %vm1390, %v1400, %v1276
      %v1411 = vsel %vm1391, %v1401, %v1305
      %v1412 = vsel %vm1392, %v1402, %v1334
      %v1413 = vsel %vm1393, %v1403, %v1363
      %vm1414 = vcmp.lt.s32.totalorder %v1404, 8
      %vm1415 = vcmp.lt.s32.totalorder %v1405, 8
      %vm1416 = vcmp.lt.s32.totalorder %v1406, 8
      %vm1417 = vcmp.lt.s32.totalorder %v1407, 8
      %vm1418 = vcmp.lt.s32.totalorder %v1408, 8
      %vm1419 = vcmp.lt.s32.totalorder %v1409, 8
      %vm1420 = vcmp.lt.s32.totalorder %v1410, 8
      %vm1421 = vcmp.lt.s32.totalorder %v1411, 8
      %vm1422 = vcmp.lt.s32.totalorder %v1412, 8
      %vm1423 = vcmp.lt.s32.totalorder %v1413, 8
      %v1424 = vsel %vm1414, 1, 0
      %v1425 = vsel %vm1415, 1, 0
      %v1426 = vsel %vm1416, 1, 0
      %v1427 = vsel %vm1417, 1, 0
      %v1428 = vsel %vm1418, 1, 0
      %v1429 = vsel %vm1419, 1, 0
      %v1430 = vsel %vm1420, 1, 0
      %v1431 = vsel %vm1421, 1, 0
      %v1432 = vsel %vm1422, 1, 0
      %v1433 = vsel %vm1423, 1, 0
      %vm1434 = vcmp.eq.s32.totalorder %v1424, 1
      %vm1435 = vcmp.eq.s32.totalorder %v1425, 1
      %vm1436 = vcmp.eq.s32.totalorder %v1426, 1
      %vm1437 = vcmp.eq.s32.totalorder %v1427, 1
      %vm1438 = vcmp.eq.s32.totalorder %v1428, 1
      %vm1439 = vcmp.eq.s32.totalorder %v1429, 1
      %vm1440 = vcmp.eq.s32.totalorder %v1430, 1
      %vm1441 = vcmp.eq.s32.totalorder %v1431, 1
      %vm1442 = vcmp.eq.s32.totalorder %v1432, 1
      %vm1443 = vcmp.eq.s32.totalorder %v1433, 1
      %v1444 = vsel %vm1434, %v1053, 0.0
      %v1445 = vsel %vm1435, %v1054, 0.0
      %v1446 = vsel %vm1436, %v1055, 0.0
      %v1447 = vsel %vm1437, %v1056, 0.0
      %v1448 = vsel %vm1438, %v1057, 0.0
      %v1449 = vsel %vm1439, %v1058, 0.0
      %v1450 = vsel %vm1440, %v1059, 0.0
      %v1451 = vsel %vm1441, %v1060, 0.0
      %v1452 = vsel %vm1442, %v1061, 0.0
      %v1453 = vsel %vm1443, %v1062, 0.0
      %v1454 = vpack.c.bf16 %v1444, %v1444
      %v1455 = vpack.c.bf16 %v1445, %v1445
      %v1456 = vpack.c.bf16 %v1446, %v1446
      %v1457 = vpack.c.bf16 %v1447, %v1447
      %v1458 = vpack.c.bf16 %v1448, %v1448
      %v1459 = vpack.c.bf16 %v1449, %v1449
      %v1460 = vpack.c.bf16 %v1450, %v1450
      %v1461 = vpack.c.bf16 %v1451, %v1451
      %v1462 = vpack.c.bf16 %v1452, %v1452
      %v1463 = vpack.c.bf16 %v1453, %v1453
      %vm1464 = vsmask.f32 1280
      %vm1465 = vsmask.f32 5392
      %vm1466 = vmor %vm1464, %vm1465
      %v1468 = vshrl.u32 %v1454, 16
      %v1470 = vrot.slane %v1468, 6
      %v1471 = vshll.u32 %v1454, 16
      %v1473 = vrot.slane %v1471, 7
      %v1474 = vor.u32 %v1470, %v1473
      %v1475 = vrot.slane %v1474, 4
      %v1477 = vshrl.u32 %v1455, 16
      %v1479 = vrot.slane %v1477, 6
      %v1480 = vshll.u32 %v1455, 16
      %v1482 = vrot.slane %v1480, 7
      %v1483 = vor.u32 %v1479, %v1482
      %v1484 = vsel %vm1466, %v1475, %v1483
      %v1485 = vrot.slane %v1483, 4
      %v1487 = vshrl.u32 %v1456, 16
      %v1489 = vrot.slane %v1487, 6
      %v1490 = vshll.u32 %v1456, 16
      %v1492 = vrot.slane %v1490, 7
      %v1493 = vor.u32 %v1489, %v1492
      %v1494 = vsel %vm1466, %v1485, %v1493
      %v1495 = vrot.slane %v1493, 4
      %v1497 = vshrl.u32 %v1457, 16
      %v1499 = vrot.slane %v1497, 6
      %v1500 = vshll.u32 %v1457, 16
      %v1502 = vrot.slane %v1500, 7
      %v1503 = vor.u32 %v1499, %v1502
      %v1504 = vsel %vm1466, %v1495, %v1503
      %v1505 = vrot.slane %v1503, 4
      %v1507 = vshrl.u32 %v1458, 16
      %v1509 = vrot.slane %v1507, 6
      %v1510 = vshll.u32 %v1458, 16
      %v1512 = vrot.slane %v1510, 7
      %v1513 = vor.u32 %v1509, %v1512
      %v1514 = vsel %vm1466, %v1505, %v1513
      %v1515 = vrot.slane %v1513, 4
      %v1517 = vshrl.u32 %v1459, 16
      %v1519 = vrot.slane %v1517, 6
      %v1520 = vshll.u32 %v1459, 16
      %v1522 = vrot.slane %v1520, 7
      %v1523 = vor.u32 %v1519, %v1522
      %v1524 = vsel %vm1466, %v1515, %v1523
      %v1525 = vrot.slane %v1523, 4
      %v1527 = vshrl.u32 %v1460, 16
      %v1529 = vrot.slane %v1527, 6
      %v1530 = vshll.u32 %v1460, 16
      %v1532 = vrot.slane %v1530, 7
      %v1533 = vor.u32 %v1529, %v1532
      %v1534 = vsel %vm1466, %v1525, %v1533
      %v1535 = vrot.slane %v1533, 4
      %v1537 = vshrl.u32 %v1461, 16
      %v1539 = vrot.slane %v1537, 6
      %v1540 = vshll.u32 %v1461, 16
      %v1542 = vrot.slane %v1540, 7
      %v1543 = vor.u32 %v1539, %v1542
      %v1544 = vsel %vm1466, %v1535, %v1543
      %v1545 = vrot.slane %v1543, 4
      %v1547 = vshrl.u32 %v1462, 16
      %v1549 = vrot.slane %v1547, 6
      %v1550 = vshll.u32 %v1462, 16
      %v1552 = vrot.slane %v1550, 7
      %v1553 = vor.u32 %v1549, %v1552
      %v1554 = vsel %vm1466, %v1545, %v1553
      %v1555 = vrot.slane %v1553, 4
      %v1557 = vshrl.u32 %v1463, 16
      %v1559 = vrot.slane %v1557, 6
      %v1560 = vshll.u32 %v1463, 16
      %v1562 = vrot.slane %v1560, 7
      %v1563 = vor.u32 %v1559, %v1562
      %v1564 = vsel %vm1466, %v1555, %v1563
      %v1565 = vrot.slane %v1563, 4
      %vm1577 = vcmask 60417
      %vm1578 = vsmask.f32 7942
      %vm1579 = vmand %vm1577, %vm1578
      %v1580 = vld [vmem:[#allocation3 + $0x4] sm:$0xe]
      %v1581 = vsel %vm1579, %v1474, %v1580
      %1582 = vst [vmem:[#allocation3 + $0x4] sm:$0xe] %v1581
      %1583 = vst.msk [vmem:[#allocation3 + $0x8] sm:$0xf] %vm283, %v1484
      %1584 = vst.msk [vmem:[#allocation3 + $0xc] sm:$0xf] %vm283, %v1494
      %1585 = vst.msk [vmem:[#allocation3 + $0x10] sm:$0xf] %vm283, %v1504
      %1586 = vst.msk [vmem:[#allocation3 + $0x14] sm:$0xf] %vm283, %v1514
      %1587 = vst.msk [vmem:[#allocation3 + $0x18] sm:$0xf] %vm283, %v1524
      %1588 = vst.msk [vmem:[#allocation3 + $0x1c] sm:$0xf] %vm283, %v1534
      %1589 = vst.msk [vmem:[#allocation3 + $0x20] sm:$0xf] %vm283, %v1544
      %1590 = vst.msk [vmem:[#allocation3 + $0x24] sm:$0xf] %vm283, %v1554
      %1591 = vst.msk [vmem:[#allocation3 + $0x28] sm:$0xf] %vm283, %v1564
      %vm1592 = vcmask 58368
      %vm1593 = vmand %vm1592, %vm1464
      %v1594 = vld [vmem:[#allocation3 + $0x2c] sm:$0x3]
      %v1595 = vsel %vm1593, %v1565, %v1594
      %1596 = vst [vmem:[#allocation3 + $0x2c] sm:$0x3] %v1595
      %v1597 = vld [vmem:[%s4] sm:$0xf]
      %v1598 = vld [vmem:[%s4 + $0x4] sm:$0xf]
      %v1599 = vld [vmem:[%s4 + $0x8] sm:$0xf]
      %v1600 = vld [vmem:[%s4 + $0xc] sm:$0xf]
      %v1601 = vld [vmem:[%s4 + $0x10] sm:$0xf]
      %v1602 = vld [vmem:[%s4 + $0x14] sm:$0xf]
      %v1603 = vld [vmem:[%s4 + $0x18] sm:$0xf]
      %v1604 = vld [vmem:[%s4 + $0x1c] sm:$0xf]
      %v1605 = vld [vmem:[%s4 + $0x20] sm:$0xf]
      %v1606 = vld [vmem:[%s5] sm:$0x1]
      %v1607 = vld [vmem:[%s6] sm:$0x1]
      %v1608 = vld [vmem:[#allocation3] sm:$0xf]
      %v1609 = vld [vmem:[#allocation3 + $0x4] sm:$0xf]
      %v1610 = vld [vmem:[#allocation3 + $0x8] sm:$0xf]
      %v1611 = vld [vmem:[#allocation3 + $0xc] sm:$0xf]
      %v1612 = vld [vmem:[#allocation3 + $0x10] sm:$0xf]
      %v1613 = vld [vmem:[#allocation3 + $0x14] sm:$0xf]
      %v1614 = vld [vmem:[#allocation3 + $0x18] sm:$0xf]
      %v1615 = vld [vmem:[#allocation3 + $0x1c] sm:$0xf]
      %v1616 = vld [vmem:[#allocation3 + $0x20] sm:$0xf]
      %v1617 = vld [vmem:[#allocation3 + $0x24] sm:$0xf]
      %v1618 = vld [vmem:[#allocation3 + $0x28] sm:$0x1]
      %v1619 = vld [vmem:[#allocation3] sm:$0xe]
      %v1620 = vld [vmem:[#allocation3 + $0x4] sm:$0xe]
      %v1621 = vld [vmem:[#allocation3 + $0x28] sm:$0xf]
      %v1622 = vld [vmem:[#allocation3 + $0x2c] sm:$0x1]
      %v1623 = vld [vmem:[#allocation3 + $0x2c] sm:$0x3]
      %v1624 = vld [vmem:[#allocation3 + $0x4] sm:$0xc]
      %v1625 = vld [vmem:[#allocation3 + $0x8] sm:$0xc]
      %v1626 = vld [vmem:[#allocation3 + $0x2c] sm:$0xf]
      %v1627 = vld [vmem:[#allocation3 + $0x30] sm:$0x3]
      %v1628 = vld [vmem:[#allocation3 + $0x30] sm:$0x7]
      %v1629 = vld [vmem:[#allocation3 + $0x8] sm:$0x8]
      %v1640 = vunpack.c.l.b16 %v1608
      %v1641 = vunpack.c.l.b16 %v1609
      %v1642 = vunpack.c.l.b16 %v1610
      %v1643 = vunpack.c.l.b16 %v1611
      %v1644 = vunpack.c.l.b16 %v1612
      %v1645 = vunpack.c.l.b16 %v1613
      %v1646 = vunpack.c.l.b16 %v1614
      %v1647 = vunpack.c.l.b16 %v1615
      %v1648 = vunpack.c.l.b16 %v1616
      %v1649 = vunpack.c.l.b16 %v1617
      %v1650 = vpack.c.b16 %v1641, %v1640
      %v1651 = vpack.c.b16 %v1643, %v1642
      %v1652 = vpack.c.b16 %v1645, %v1644
      %v1653 = vpack.c.b16 %v1647, %v1646
      %v1654 = vpack.c.b16 %v1649, %v1648
      %v1656 = vunpack.c.l.b16 %v1618
      %v1657 = vpack.c.b16 %v1656, %v1656
      %v1659 = vshrl.u32 %v1650, 16
      %v1661 = vshll.u32 %v1650, 16
      %v1663 = vrot.slane %v1661, 1
      %v1664 = vor.u32 %v1659, %v1663
      %v1666 = vshll.u32 %v1651, 16
      %v1668 = vrot.slane %v1666, 1
      %v1669 = vsel %vm563, %v1664, %v1668
      %v1670 = vshrl.u32 %v1651, 16
      %v1672 = vor.u32 %v1670, %v1668
      %v1674 = vshll.u32 %v1652, 16
      %v1676 = vrot.slane %v1674, 1
      %v1677 = vsel %vm563, %v1672, %v1676
      %v1678 = vshrl.u32 %v1652, 16
      %v1680 = vor.u32 %v1678, %v1676
      %v1682 = vshll.u32 %v1653, 16
      %v1684 = vrot.slane %v1682, 1
      %v1685 = vsel %vm563, %v1680, %v1684
      %v1686 = vshrl.u32 %v1653, 16
      %v1688 = vor.u32 %v1686, %v1684
      %v1690 = vshll.u32 %v1654, 16
      %v1692 = vrot.slane %v1690, 1
      %v1693 = vsel %vm563, %v1688, %v1692
      %v1694 = vshrl.u32 %v1654, 16
      %v1696 = vor.u32 %v1694, %v1692
      %v1698 = vshll.u32 %v1657, 16
      %v1700 = vrot.slane %v1698, 1
      %v1701 = vsel %vm563, %v1696, %v1700
      %1702 = vrot.lane.b32.xlu0 %v1669, 8
      %v1703 = vpop.permute.xlu0 %1702
      %1704 = vrot.lane.b32.xlu0 %v1677, 8
      %v1705 = vpop.permute.xlu0 %1704
      %1706 = vrot.lane.b32.xlu0 %v1685, 8
      %v1707 = vpop.permute.xlu0 %1706
      %1708 = vrot.lane.b32.xlu0 %v1693, 8
      %v1709 = vpop.permute.xlu0 %1708
      %1710 = vrot.lane.b32.xlu0 %v1701, 8
      %v1711 = vpop.permute.xlu0 %1710
      %v1713 = vunpack.c.l.b16 %v1619
      %v1714 = vpack.c.b16 %v1641, %v1713
      %v1715 = vrot.slane %v1714, 1
      %v1716 = vrot.slane %v1651, 1
      %v1717 = vsel %vm621, %v1715, %v1716
      %v1718 = vrot.slane %v1652, 1
      %v1719 = vsel %vm621, %v1716, %v1718
      %v1720 = vrot.slane %v1653, 1
      %v1721 = vsel %vm621, %v1718, %v1720
      %v1722 = vrot.slane %v1654, 1
      %v1723 = vsel %vm621, %v1720, %v1722
      %v1724 = vrot.slane %v1657, 1
      %v1725 = vsel %vm621, %v1722, %v1724
      %1726 = vrot.lane.b32.xlu0 %v1717, 16
      %v1727 = vpop.permute.xlu0 %1726
      %1728 = vrot.lane.b32.xlu0 %v1719, 16
      %v1729 = vpop.permute.xlu0 %1728
      %1730 = vrot.lane.b32.xlu0 %v1721, 16
      %v1731 = vpop.permute.xlu0 %1730
      %1732 = vrot.lane.b32.xlu0 %v1723, 16
      %v1733 = vpop.permute.xlu0 %1732
      %1734 = vrot.lane.b32.xlu0 %v1725, 16
      %v1735 = vpop.permute.xlu0 %1734
      %v1739 = vunpack.c.l.b16 %v1620
      %v1740 = vunpack.c.l.b16 %v1621
      %v1741 = vunpack.c.l.b16 %v1622
      %v1742 = vpack.c.b16 %v1642, %v1739
      %v1743 = vpack.c.b16 %v1644, %v1643
      %v1744 = vpack.c.b16 %v1646, %v1645
      %v1745 = vpack.c.b16 %v1648, %v1647
      %v1746 = vpack.c.b16 %v1740, %v1649
      %v1747 = vpack.c.b16 %v1741, %v1741
      %v1748 = vrot.slane %v1742, 1
      %v1749 = vrot.slane %v1743, 1
      %v1750 = vsel %vm621, %v1748, %v1749
      %v1751 = vrot.slane %v1744, 1
      %v1752 = vsel %vm621, %v1749, %v1751
      %v1753 = vrot.slane %v1745, 1
      %v1754 = vsel %vm621, %v1751, %v1753
      %v1755 = vrot.slane %v1746, 1
      %v1756 = vsel %vm621, %v1753, %v1755
      %v1757 = vrot.slane %v1747, 1
      %v1758 = vsel %vm621, %v1755, %v1757
      %1759 = vrot.lane.b32.xlu0 %v1750, 24
      %v1760 = vpop.permute.xlu0 %1759
      %1761 = vrot.lane.b32.xlu0 %v1752, 24
      %v1762 = vpop.permute.xlu0 %1761
      %1763 = vrot.lane.b32.xlu0 %v1754, 24
      %v1764 = vpop.permute.xlu0 %1763
      %1765 = vrot.lane.b32.xlu0 %v1756, 24
      %v1766 = vpop.permute.xlu0 %1765
      %1767 = vrot.lane.b32.xlu0 %v1758, 24
      %v1768 = vpop.permute.xlu0 %1767
      %v1770 = vunpack.c.l.b16 %v1623
      %v1771 = vpack.c.b16 %v1770, %v1770
      %v1773 = vshrl.u32 %v1742, 16
      %v1775 = vrot.slane %v1773, 1
      %v1776 = vshll.u32 %v1742, 16
      %v1778 = vrot.slane %v1776, 2
      %v1779 = vor.u32 %v1775, %v1778
      %v1781 = vshrl.u32 %v1743, 16
      %v1783 = vrot.slane %v1781, 1
      %v1784 = vshll.u32 %v1743, 16
      %v1786 = vrot.slane %v1784, 2
      %v1787 = vor.u32 %v1783, %v1786
      %v1788 = vsel %vm679, %v1779, %v1787
      %v1790 = vshrl.u32 %v1744, 16
      %v1792 = vrot.slane %v1790, 1
      %v1793 = vshll.u32 %v1744, 16
      %v1795 = vrot.slane %v1793, 2
      %v1796 = vor.u32 %v1792, %v1795
      %v1797 = vsel %vm679, %v1787, %v1796
      %v1799 = vshrl.u32 %v1745, 16
      %v1801 = vrot.slane %v1799, 1
      %v1802 = vshll.u32 %v1745, 16
      %v1804 = vrot.slane %v1802, 2
      %v1805 = vor.u32 %v1801, %v1804
      %v1806 = vsel %vm679, %v1796, %v1805
      %v1808 = vshrl.u32 %v1746, 16
      %v1810 = vrot.slane %v1808, 1
      %v1811 = vshll.u32 %v1746, 16
      %v1813 = vrot.slane %v1811, 2
      %v1814 = vor.u32 %v1810, %v1813
      %v1815 = vsel %vm679, %v1805, %v1814
      %v1817 = vshrl.u32 %v1771, 16
      %v1819 = vrot.slane %v1817, 1
      %v1820 = vshll.u32 %v1771, 16
      %v1822 = vrot.slane %v1820, 2
      %v1823 = vor.u32 %v1819, %v1822
      %v1824 = vsel %vm679, %v1814, %v1823
      %1825 = vrot.lane.b32.xlu0 %v1788, 32
      %v1826 = vpop.permute.xlu0 %1825
      %1827 = vrot.lane.b32.xlu0 %v1797, 32
      %v1828 = vpop.permute.xlu0 %1827
      %1829 = vrot.lane.b32.xlu0 %v1806, 32
      %v1830 = vpop.permute.xlu0 %1829
      %1831 = vrot.lane.b32.xlu0 %v1815, 32
      %v1832 = vpop.permute.xlu0 %1831
      %1833 = vrot.lane.b32.xlu0 %v1824, 32
      %v1834 = vpop.permute.xlu0 %1833
      %v1836 = vunpack.c.l.b16 %v1624
      %v1837 = vpack.c.b16 %v1642, %v1836
      %v1838 = vrot.slane %v1837, 2
      %v1839 = vrot.slane %v1743, 2
      %v1840 = vsel %vm746, %v1838, %v1839
      %v1841 = vrot.slane %v1744, 2
      %v1842 = vsel %vm746, %v1839, %v1841
      %v1843 = vrot.slane %v1745, 2
      %v1844 = vsel %vm746, %v1841, %v1843
      %v1845 = vrot.slane %v1746, 2
      %v1846 = vsel %vm746, %v1843, %v1845
      %v1847 = vrot.slane %v1771, 2
      %v1848 = vsel %vm746, %v1845, %v1847
      %1849 = vrot.lane.b32.xlu0 %v1840, 40
      %v1850 = vpop.permute.xlu0 %1849
      %1851 = vrot.lane.b32.xlu0 %v1842, 40
      %v1852 = vpop.permute.xlu0 %1851
      %1853 = vrot.lane.b32.xlu0 %v1844, 40
      %v1854 = vpop.permute.xlu0 %1853
      %1855 = vrot.lane.b32.xlu0 %v1846, 40
      %v1856 = vpop.permute.xlu0 %1855
      %1857 = vrot.lane.b32.xlu0 %v1848, 40
      %v1858 = vpop.permute.xlu0 %1857
      %v1862 = vunpack.c.l.b16 %v1625
      %v1863 = vunpack.c.l.b16 %v1626
      %v1864 = vunpack.c.l.b16 %v1627
      %v1865 = vpack.c.b16 %v1643, %v1862
      %v1866 = vpack.c.b16 %v1863, %v1740
      %v1867 = vpack.c.b16 %v1864, %v1864
      %v1868 = vrot.slane %v1865, 2
      %v1869 = vrot.slane %v1652, 2
      %v1870 = vsel %vm746, %v1868, %v1869
      %v1871 = vrot.slane %v1653, 2
      %v1872 = vsel %vm746, %v1869, %v1871
      %v1873 = vrot.slane %v1654, 2
      %v1874 = vsel %vm746, %v1871, %v1873
      %v1875 = vrot.slane %v1866, 2
      %v1876 = vsel %vm746, %v1873, %v1875
      %v1877 = vrot.slane %v1867, 2
      %v1878 = vsel %vm746, %v1875, %v1877
      %1879 = vrot.lane.b32.xlu0 %v1870, 48
      %v1880 = vpop.permute.xlu0 %1879
      %1881 = vrot.lane.b32.xlu0 %v1872, 48
      %v1882 = vpop.permute.xlu0 %1881
      %1883 = vrot.lane.b32.xlu0 %v1874, 48
      %v1884 = vpop.permute.xlu0 %1883
      %1885 = vrot.lane.b32.xlu0 %v1876, 48
      %v1886 = vpop.permute.xlu0 %1885
      %1887 = vrot.lane.b32.xlu0 %v1878, 48
      %v1888 = vpop.permute.xlu0 %1887
      %v1890 = vunpack.c.l.b16 %v1628
      %v1891 = vpack.c.b16 %v1890, %v1890
      %v1893 = vshrl.u32 %v1865, 16
      %v1895 = vrot.slane %v1893, 2
      %v1896 = vshll.u32 %v1865, 16
      %v1898 = vrot.slane %v1896, 3
      %v1899 = vor.u32 %v1895, %v1898
      %v1900 = vrot.slane %v1678, 2
      %v1901 = vrot.slane %v1674, 3
      %v1902 = vor.u32 %v1900, %v1901
      %v1903 = vsel %vm801, %v1899, %v1902
      %v1904 = vrot.slane %v1686, 2
      %v1905 = vrot.slane %v1682, 3
      %v1906 = vor.u32 %v1904, %v1905
      %v1907 = vsel %vm801, %v1902, %v1906
      %v1908 = vrot.slane %v1694, 2
      %v1909 = vrot.slane %v1690, 3
      %v1910 = vor.u32 %v1908, %v1909
      %v1911 = vsel %vm801, %v1906, %v1910
      %v1913 = vshrl.u32 %v1866, 16
      %v1915 = vrot.slane %v1913, 2
      %v1916 = vshll.u32 %v1866, 16
      %v1918 = vrot.slane %v1916, 3
      %v1919 = vor.u32 %v1915, %v1918
      %v1920 = vsel %vm801, %v1910, %v1919
      %v1922 = vshrl.u32 %v1891, 16
      %v1924 = vrot.slane %v1922, 2
      %v1925 = vshll.u32 %v1891, 16
      %v1927 = vrot.slane %v1925, 3
      %v1928 = vor.u32 %v1924, %v1927
      %v1929 = vsel %vm801, %v1919, %v1928
      %1930 = vrot.lane.b32.xlu0 %v1903, 56
      %v1931 = vpop.permute.xlu0 %1930
      %1932 = vrot.lane.b32.xlu0 %v1907, 56
      %v1933 = vpop.permute.xlu0 %1932
      %1934 = vrot.lane.b32.xlu0 %v1911, 56
      %v1935 = vpop.permute.xlu0 %1934
      %1936 = vrot.lane.b32.xlu0 %v1920, 56
      %v1937 = vpop.permute.xlu0 %1936
      %1938 = vrot.lane.b32.xlu0 %v1929, 56
      %v1939 = vpop.permute.xlu0 %1938
      %v1941 = vunpack.c.l.b16 %v1629
      %v1942 = vpack.c.b16 %v1643, %v1941
      %v1943 = vrot.slane %v1942, 3
      %v1944 = vrot.slane %v1652, 3
      %v1945 = vsel %vm853, %v1943, %v1944
      %v1946 = vrot.slane %v1653, 3
      %v1947 = vsel %vm853, %v1944, %v1946
      %v1948 = vrot.slane %v1654, 3
      %v1949 = vsel %vm853, %v1946, %v1948
      %v1950 = vrot.slane %v1866, 3
      %v1951 = vsel %vm853, %v1948, %v1950
      %v1952 = vrot.slane %v1891, 3
      %v1953 = vsel %vm853, %v1950, %v1952
      %1954 = vrot.lane.b32.xlu0 %v1945, 64
      %v1955 = vpop.permute.xlu0 %1954
      %1956 = vrot.lane.b32.xlu0 %v1947, 64
      %v1957 = vpop.permute.xlu0 %1956
      %1958 = vrot.lane.b32.xlu0 %v1949, 64
      %v1959 = vpop.permute.xlu0 %1958
      %1960 = vrot.lane.b32.xlu0 %v1951, 64
      %v1961 = vpop.permute.xlu0 %1960
      %1962 = vrot.lane.b32.xlu0 %v1953, 64
      %v1963 = vpop.permute.xlu0 %1962
      %v1965 = vsel %vm886, %v1650, %v1703
      %v1967 = vsel %vm886, %v1651, %v1705
      %v1969 = vsel %vm886, %v1652, %v1707
      %v1971 = vsel %vm886, %v1653, %v1709
      %v1973 = vsel %vm886, %v1654, %v1711
      %v1975 = vsel %vm908, %v1965, %v1727
      %v1977 = vsel %vm908, %v1967, %v1729
      %v1979 = vsel %vm908, %v1969, %v1731
      %v1981 = vsel %vm908, %v1971, %v1733
      %v1983 = vsel %vm908, %v1973, %v1735
      %v1985 = vsel %vm930, %v1975, %v1760
      %v1987 = vsel %vm930, %v1977, %v1762
      %v1989 = vsel %vm930, %v1979, %v1764
      %v1991 = vsel %vm930, %v1981, %v1766
      %v1993 = vsel %vm930, %v1983, %v1768
      %v1995 = vsel %vm952, %v1985, %v1826
      %v1997 = vsel %vm952, %v1987, %v1828
      %v1999 = vsel %vm952, %v1989, %v1830
      %v2001 = vsel %vm952, %v1991, %v1832
      %v2003 = vsel %vm952, %v1993, %v1834
      %vm2004 = vcmask 326656
      %v2006 = vsel %vm2004, %v1995, %v1850
      %v2008 = vsel %vm2004, %v1997, %v1852
      %v2010 = vsel %vm2004, %v1999, %v1854
      %v2012 = vsel %vm2004, %v2001, %v1856
      %v2014 = vsel %vm2004, %v2003, %v1858
      %vm2015 = vcmask 392192
      %v2017 = vsel %vm2015, %v2006, %v1880
      %v2019 = vsel %vm2015, %v2008, %v1882
      %v2021 = vsel %vm2015, %v2010, %v1884
      %v2023 = vsel %vm2015, %v2012, %v1886
      %v2025 = vsel %vm2015, %v2014, %v1888
      %vm2026 = vcmask 457728
      %v2028 = vsel %vm2026, %v2017, %v1931
      %v2030 = vsel %vm2026, %v2019, %v1933
      %v2032 = vsel %vm2026, %v2021, %v1935
      %v2034 = vsel %vm2026, %v2023, %v1937
      %v2036 = vsel %vm2026, %v2025, %v1939
      %vm2037 = vcmask 523264
      %v2039 = vsel %vm2037, %v2028, %v1955
      %v2041 = vsel %vm2037, %v2030, %v1957
      %v2043 = vsel %vm2037, %v2032, %v1959
      %v2045 = vsel %vm2037, %v2034, %v1961
      %v2047 = vsel %vm2037, %v2036, %v1963
      %v2057 = vunpack.c.l.b16 %v1597
      %v2058 = vunpack.c.l.b16 %v1598
      %v2059 = vunpack.c.l.b16 %v1599
      %v2060 = vunpack.c.l.b16 %v1600
      %v2061 = vunpack.c.l.b16 %v1601
      %v2062 = vunpack.c.l.b16 %v1602
      %v2063 = vunpack.c.l.b16 %v1603
      %v2064 = vunpack.c.l.b16 %v1604
      %v2065 = vunpack.c.l.b16 %v1605
      %v2066 = vpack.c.b16 %v2058, %v2057
      %v2067 = vpack.c.b16 %v2060, %v2059
      %v2068 = vpack.c.b16 %v2062, %v2061
      %v2069 = vpack.c.b16 %v2064, %v2063
      %v2070 = vpack.c.b16 %v2065, %v2065
      %vm2075 = vcmask 588800
      %v2076 = vsel %vm2075, %v2039, 0
      %v2078 = vsel %vm2075, %v2041, 0
      %v2080 = vsel %vm2075, %v2043, 0
      %v2082 = vsel %vm2075, %v2045, 0
      %v2084 = vsel %vm2075, %v2047, 0
      %vm2086 = vcmask 1043456
      %v2088 = vsel %vm2086, %v2070, 0
      %2090 = vmatpush.bf16.msra.mxu0 0
      %2091 = vmatpush.bf16.msra.mxu0 0
      %2092 = vmatpush.bf16.msra.mxu0 0
      %2093 = vmatpush.bf16.msra.mxu0 %v2088
      %2094 = vmatpush.bf16.msra.mxu0 %v2069
      %2095 = vmatpush.bf16.msra.mxu0 %v2068
      %2096 = vmatpush.bf16.msra.mxu0 %v2067
      %2097 = vmatpush.bf16.msra.mxu0 %v2066
      %2098 = vmatmul.bf16.gmra.mxu0 %v2076
      %v2099 = vpop.f32.mrf.mxu0
      %v2100 = vadd.f32 0.0, %v2099
      %v2101 = vpop.f32.mrf.mxu0
      %v2102 = vadd.f32 0.0, %v2101
      %2103 = vmatmul.bf16.gmra.mxu0 %v2078
      %v2104 = vpop.f32.mrf.mxu0
      %v2105 = vadd.f32 0.0, %v2104
      %v2106 = vpop.f32.mrf.mxu0
      %v2107 = vadd.f32 0.0, %v2106
      %2108 = vmatmul.bf16.gmra.mxu0 %v2080
      %v2109 = vpop.f32.mrf.mxu0
      %v2110 = vadd.f32 0.0, %v2109
      %v2111 = vpop.f32.mrf.mxu0
      %v2112 = vadd.f32 0.0, %v2111
      %2113 = vmatmul.bf16.gmra.mxu0 %v2082
      %v2114 = vpop.f32.mrf.mxu0
      %v2115 = vadd.f32 0.0, %v2114
      %v2116 = vpop.f32.mrf.mxu0
      %v2117 = vadd.f32 0.0, %v2116
      %2118 = vmatmul.bf16.gmra.mxu0 %v2084
      %v2119 = vpop.f32.mrf.mxu0
      %v2120 = vadd.f32 0.0, %v2119
      %v2121 = vpop.f32.mrf.mxu0
      %v2122 = vadd.f32 0.0, %v2121
      %2123 = vdwg.mxu0
      %v2125 = vperm.slane %v1606, 0
      %v2127 = vmul.f32 %v2100, %v2125
      %v2128 = vmul.f32 %v2102, %v2125
      %v2129 = vmul.f32 %v2105, %v2125
      %v2130 = vmul.f32 %v2107, %v2125
      %v2131 = vmul.f32 %v2110, %v2125
      %v2132 = vmul.f32 %v2112, %v2125
      %v2133 = vmul.f32 %v2115, %v2125
      %v2134 = vmul.f32 %v2117, %v2125
      %v2135 = vmul.f32 %v2120, %v2125
      %v2136 = vmul.f32 %v2122, %v2125
      %v2138 = vperm.slane %v1607, 0
      %v2140 = vadd.f32 %v2127, %v2138
      %v2141 = vadd.f32 %v2128, %v2138
      %v2142 = vadd.f32 %v2129, %v2138
      %v2143 = vadd.f32 %v2130, %v2138
      %v2144 = vadd.f32 %v2131, %v2138
      %v2145 = vadd.f32 %v2132, %v2138
      %v2146 = vadd.f32 %v2133, %v2138
      %v2147 = vadd.f32 %v2134, %v2138
      %v2148 = vadd.f32 %v2135, %v2138
      %v2149 = vadd.f32 %v2136, %v2138
      %v2150 = vmax.f32 %v2140, 0.0
      %v2151 = vmax.f32 %v2141, 0.0
      %v2152 = vmax.f32 %v2142, 0.0
      %v2153 = vmax.f32 %v2143, 0.0
      %v2154 = vmax.f32 %v2144, 0.0
      %v2155 = vmax.f32 %v2145, 0.0
      %v2156 = vmax.f32 %v2146, 0.0
      %v2157 = vmax.f32 %v2147, 0.0
      %v2158 = vmax.f32 %v2148, 0.0
      %v2159 = vmax.f32 %v2149, 0.0
      %v2160 = vpack.c.bf16 %v2150, %v2150
      %v2161 = vpack.c.bf16 %v2151, %v2151
      %v2162 = vpack.c.bf16 %v2152, %v2152
      %v2163 = vpack.c.bf16 %v2153, %v2153
      %v2164 = vpack.c.bf16 %v2154, %v2154
      %v2165 = vpack.c.bf16 %v2155, %v2155
      %v2166 = vpack.c.bf16 %v2156, %v2156
      %v2167 = vpack.c.bf16 %v2157, %v2157
      %v2168 = vpack.c.bf16 %v2158, %v2158
      %v2169 = vpack.c.bf16 %v2159, %v2159
      %2170 = vst.msk [vmem:[%s278] sm:$0xf] %vm283, %v2160
      %2171 = vst.msk [vmem:[%s278 + $0x4] sm:$0xf] %vm283, %v2161
      %2172 = vst.msk [vmem:[%s278 + $0x8] sm:$0xf] %vm283, %v2162
      %2173 = vst.msk [vmem:[%s278 + $0xc] sm:$0xf] %vm283, %v2163
      %2174 = vst.msk [vmem:[%s278 + $0x10] sm:$0xf] %vm283, %v2164
      %2175 = vst.msk [vmem:[%s278 + $0x14] sm:$0xf] %vm283, %v2165
      %2176 = vst.msk [vmem:[%s278 + $0x18] sm:$0xf] %vm283, %v2166
      %2177 = vst.msk [vmem:[%s278 + $0x1c] sm:$0xf] %vm283, %v2167
      %2178 = vst.msk [vmem:[%s278 + $0x20] sm:$0xf] %vm283, %v2168
      %2179 = vst.msk [vmem:[%s278 + $0x24] sm:$0xf] %vm283, %v2169
      %p2180 = scmp.lt.s32.totalorder %s18, 1
      %s2181 = scalar_select %p2180, %s18, 1
      %s2182 = smul.addr %s2181, 10
      %s2183 = smul.addr %s2182, 4
      %s2184 = scalar_lea.vmem %s7, %s2183
      // Predicated region
      $region49: #{down_block_forward.1} parent=47 // pred_check
        %p2185 = pneg %p188
      $region50: #{down_block_forward.1} parent=47 // pred_check_branch
        %2187 = sbr.rel (%p2185) target = $region52
      $region51: #{down_block_forward.1} parent=47 // pred_region
        _
      $region52: #{down_block_forward.1} parent=47 // pred_fallthru
        _
    $region48: #{down_block_forward.1} parent=5 // pred_fallthru
      _
    %p2188 = scmp.le.s32.totalorder 2, %s13
    // Predicated region
    $region53: #{down_block_forward.1} parent=5 // pred_check
      %p2189 = pneg %p2188
    $region54: #{down_block_forward.1} parent=5 // pred_check_branch
      %2191 = sbr.rel (%p2189) target = $region56
    $region55: #{down_block_forward.1} parent=5 // pred_region
      %s2192 = ssub.s32 %s13, 2
      // Predicated region
      $region57: #{down_block_forward.1} parent=55 // pred_check
        %p2193 = pneg %p194
      $region58: #{down_block_forward.1} parent=55 // pred_check_branch
        %2195 = sbr.rel (%p2193) target = $region60
      $region59: #{down_block_forward.1} parent=55 // pred_region
        %p2196 = scmp.lt.s32.totalorder %s19, 1
        %s2197 = scalar_select %p2196, %s19, 1
        %s2198 = smul.addr %s2197, 10
        %s2199 = smul.addr %s2198, 4
        %s2200 = scalar_lea.vmem %s7, %s2199
      $region60: #{down_block_forward.1} parent=55 // pred_fallthru
        _
    $region56: #{down_block_forward.1} parent=5 // pred_fallthru
      _
  $region6: #{down_block_forward.1} parent=0 // loop_footer
    %s17 = sadd.s32 1, %s13
  $region7: #{down_block_forward.1} parent=0 // loop_footer_branch
    %12 = sbr.rel target = $region3
  $region8: #{down_block_forward.1} parent=0 // loop_exit
    _

</llo_original>
